<compile_context>
chip_gen: v6e
topology: v6e:2x2x1
jax: 0.10.0
libtpu: 0.0.40
codegen_flags: <defaults>
</compile_context>

<pallas_src>
import functools
import math

import numpy as np
import jax
import jax.numpy as jnp
from jax.experimental import pallas as pl
from jax.experimental.pallas import tpu as pltpu

LOG_2PI = math.log(2.0 * math.pi)


def _round_up(x, m):
    return ((x + m - 1) // m) * m


def _vade_kernel(x_ref, y_ref, eps_ref, w1x_ref, w1y_ref, b1_ref,
                 wmu_ref, bmu_ref, wlv_ref, blv_ref, qab_ref, c0_ref,
                 yita_ref, z_ref, *, compute_dtype):
    f32 = jnp.float32

    # --- recognize net: bf16 MXU operands, f32 accumulation, f32 elementwise ---
    xb = x_ref[...].astype(compute_dtype)
    yb = y_ref[...].astype(compute_dtype)
    h = jnp.tanh(
        jnp.dot(xb, w1x_ref[...], preferred_element_type=f32)
        + jnp.dot(yb, w1y_ref[...], preferred_element_type=f32)
        + b1_ref[...]
    )                                                            # (TB, H) f32
    hb = h.astype(compute_dtype)
    z_mu = jnp.dot(hb, wmu_ref[...], preferred_element_type=f32) + bmu_ref[...]
    z_lv = jnp.dot(hb, wlv_ref[...], preferred_element_type=f32) + blv_ref[...]

    # --- reparameterization trick (eps kept in f32) ---
    z = z_mu + jnp.exp(0.5 * z_lv) * eps_ref[...]                # (TB, L) f32
    z_ref[...] = z

    # --- GMM posterior: constants folded in wrapper, single fused matmul ---
    zcat = jnp.concatenate([z * z, z], axis=-1)                  # (TB, 2L) f32
    log_yita = (jnp.dot(zcat, qab_ref[...], preferred_element_type=f32)
                + c0_ref[...])                                   # (TB, C)
    yita_ref[...] = jnp.exp(log_yita)


def vade_posterior(x, y, params, eps, *, block_rows=4096, compute_dtype=jnp.bfloat16):
    """Fused recognize-net + GMM-posterior Pallas kernel (returns yita, z)."""
    f32 = jnp.float32
    B, DX = x.shape
    DY = y.shape[1]
    C, L = params["mu_c"].shape
    H = params["w1x"].shape[1]

    # ---- resident recognize-net parameters (VMEM-resident across grid steps) ----
    w1x = params["w1x"].astype(compute_dtype)                    # (DX, H)
    w1y = params["w1y"].astype(compute_dtype)                    # (DY, H)
    b1 = params["b1"].astype(f32).reshape(1, H)
    wmu = params["wmu"].astype(compute_dtype)                    # (H, L)
    bmu = params["bmu"].astype(f32).reshape(1, L)
    wlv = params["wlv"].astype(compute_dtype)                    # (H, L)
    blv = params["blv"].astype(f32).reshape(1, L)

    # ---- precomputed GMM constants (f32, unpadded, computed once in wrapper) ----
    mu_c = params["mu_c"].astype(f32)                            # (C, L)
    lsc = params["log_sigma2_c"].astype(f32)                     # (C, L)
    pi = params["pi"].astype(f32).reshape(-1)                    # (C,)
    inv_s = jnp.exp(-lsc)
    qa = (-0.5 * inv_s).T                                        # (L, C)
    qb = (mu_c * inv_s).T                                        # (L, C)
    qab = jnp.concatenate([qa, qb], axis=0)                      # (2L, C)
    c0 = (jnp.log(pi)
          - 0.5 * jnp.sum(LOG_2PI + lsc, axis=1)
          - 0.5 * jnp.sum(mu_c * mu_c * inv_s, axis=1)).reshape(1, C)

    # ---- batch tile selection: big tiles, >=2 grid steps, VMEM-aware cap ----
    block_rows = max(8, _round_up(block_rows, 8))
    tb = min(block_rows, max(8, _round_up(pl.cdiv(B, 2), 8)))    # >=2 steps for v7x TCs
    bytes_per_row = (DX + DY + L) * 4 + (C + L) * 4              # streamed in + out (f32)
    vmem_stream_budget = 20 * 1024 * 1024                        # double-buffered streams
    max_tb = max(8, ((vmem_stream_budget // (2 * bytes_per_row)) // 8) * 8)
    tb = min(tb, max_tb)
    nb = pl.cdiv(B, tb)                                          # ragged last tile OK

    flops = 2 * B * (DX * H + DY * H + 2 * H * L + 2 * L * C)
    transcendentals = B * (H + L + C)
    bytes_accessed = (B * (DX + DY + L) * 4                      # streamed f32 inputs
                      + ((DX + DY) * H + 2 * H * L) * 2          # bf16 weights
                      + (H + 2 * L + 2 * L * C + C) * 4          # f32 consts
                      + B * (C + L) * 4)                         # outputs

    kernel = functools.partial(_vade_kernel, compute_dtype=compute_dtype)

    yita, z_out = pl.pallas_call(
        kernel,
        grid=(nb,),
        in_specs=[
            pl.BlockSpec((tb, DX), lambda i: (i, 0)),        # x         (streamed)
            pl.BlockSpec((tb, DY), lambda i: (i, 0)),        # y         (streamed)
            pl.BlockSpec((tb, L), lambda i: (i, 0)),         # eps       (streamed)
            pl.BlockSpec((DX, H), lambda i: (0, 0)),         # w1x       (resident)
            pl.BlockSpec((DY, H), lambda i: (0, 0)),         # w1y       (resident)
            pl.BlockSpec((1, H), lambda i: (0, 0)),          # b1        (resident)
            pl.BlockSpec((H, L), lambda i: (0, 0)),          # wmu       (resident)
            pl.BlockSpec((1, L), lambda i: (0, 0)),          # bmu       (resident)
            pl.BlockSpec((H, L), lambda i: (0, 0)),          # wlv       (resident)
            pl.BlockSpec((1, L), lambda i: (0, 0)),          # blv       (resident)
            pl.BlockSpec((2 * L, C), lambda i: (0, 0)),      # qab       (resident)
            pl.BlockSpec((1, C), lambda i: (0, 0)),          # c0        (resident)
        ],
        out_specs=(pl.BlockSpec((tb, C), lambda i: (i, 0)),
                   pl.BlockSpec((tb, L), lambda i: (i, 0))),
        out_shape=(jax.ShapeDtypeStruct((B, C), jnp.float32),
                   jax.ShapeDtypeStruct((B, L), jnp.float32)),
        compiler_params=pltpu.CompilerParams(
            dimension_semantics=("parallel",),
            vmem_limit_bytes=32 * 1024 * 1024),
        cost_estimate=pl.CostEstimate(flops=flops,
                                      transcendentals=transcendentals,
                                      bytes_accessed=bytes_accessed),
    )(x.astype(f32), y.astype(f32), eps.astype(f32),
      w1x, w1y, b1, wmu, bmu, wlv, blv, qab, c0)

    return yita, z_out


def _ref_forward(x, y, p, eps, compute_dtype):
    """NumPy reference (PyTorch semantics), mirroring the kernel's bf16 roundings."""
    if jnp.dtype(compute_dtype) == jnp.dtype(jnp.float32):
        rnd = lambda a: np.asarray(a, np.float64)
    else:
        rnd = lambda a: np.asarray(
            jnp.asarray(np.asarray(a, np.float32)).astype(compute_dtype)
            .astype(jnp.float32), np.float64)

    x64, y64 = rnd(np.asarray(x)), rnd(np.asarray(y))
    w1x, w1y = rnd(np.asarray(p["w1x"])), rnd(np.asarray(p["w1y"]))
    wmu, wlv = rnd(np.asarray(p["wmu"])), rnd(np.asarray(p["wlv"]))
    b1 = np.asarray(p["b1"], np.float64).reshape(1, -1)
    bmu = np.asarray(p["bmu"], np.float64).reshape(1, -1)
    blv = np.asarray(p["blv"], np.float64).reshape(1, -1)

    h = rnd(np.float32(np.tanh(x64 @ w1x + y64 @ w1y + b1)))     # tanh in f32, h -> bf16
    z_mu = h @ wmu + bmu
    z_lv = h @ wlv + blv
    z = z_mu + np.exp(0.5 * z_lv) * np.asarray(eps, np.float64)

    mu_c = np.asarray(p["mu_c"], np.float64)
    lsc = np.asarray(p["log_sigma2_c"], np.float64)
    pi = np.asarray(p["pi"], np.float64).reshape(-1)
    G = np.stack([-0.5 * np.sum(LOG_2PI + lsc[c] + (z - mu_c[c]) ** 2 / np.exp(lsc[c]),
                                axis=1)
                  for c in range(mu_c.shape[0])], axis=1)
    yita = np.exp(np.log(pi)[None, :] + G)
    return yita, z


if __name__ == "__main__":
    # Small config consistent with Model.__init__ (VaDE-style clustering head).
    B, DX, DY, H, L, C = 256, 64, 64, 64, 32, 10

    key = jax.random.PRNGKey(0)
    ks = jax.random.split(key, 12)

    x = jax.random.normal(ks[0], (B, DX), jnp.float32)       # post_encoder final state
    y = jax.random.normal(ks[1], (B, DY), jnp.float32)       # response_encoder final state
    eps = jax.random.normal(ks[2], (B, L), jnp.float32)      # sampled_latents

    s = 0.05
    pi_raw = jax.random.uniform(ks[10], (C,), jnp.float32, 0.5, 1.5)
    params = {
        "w1x": s * jax.random.normal(ks[3], (DX, H), jnp.float32),
        "w1y": s * jax.random.normal(ks[4], (DY, H), jnp.float32),
        "b1":  s * jax.random.normal(ks[5], (H,), jnp.float32),
        "wmu": s * jax.random.normal(ks[6], (H, L), jnp.float32),
        "bmu": s * jax.random.normal(ks[7], (L,), jnp.float32),
        "wlv": s * jax.random.normal(ks[8], (H, L), jnp.float32),
        "blv": s * jax.random.normal(ks[9], (L,), jnp.float32),
        # GMM parameters (pi_, mu_c, log_sigma2_c) as in Model.__init__ (post-training values)
        "pi": pi_raw / jnp.sum(pi_raw),
        "mu_c": 0.5 * jax.random.normal(ks[11], (C, L), jnp.float32),
        "log_sigma2_c": 0.1 * jax.random.normal(jax.random.fold_in(key, 99), (C, L), jnp.float32),
    }

    yita, z = vade_posterior(x, y, params, eps, compute_dtype=jnp.bfloat16)
    yita = jax.block_until_ready(yita)
    z = jax.block_until_ready(z)

    # Correctness check against a rounding-matched NumPy reference.
    yita_ref, z_ref = _ref_forward(x, y, params, eps, compute_dtype=jnp.bfloat16)
    assert np.allclose(np.asarray(z), z_ref, rtol=5e-3, atol=1e-4), "z mismatch"
    assert np.allclose(np.asarray(yita), yita_ref, rtol=2e-2, atol=1e-37), "yita mismatch"

    # Cluster assignment (argmax over yita), as in forward()/predict().
    _ = np.argmax(np.asarray(yita), axis=1)

    print("KERNEL_OK")
</pallas_src>

<mosaic_0001>
module attributes {stable_mosaic.version = 11 : i64} {
  func.func @_vade_kernel(%arg0: i32, %arg1: memref<128x64xf32, #tpu.memory_space<vmem>>, %arg2: memref<128x64xf32, #tpu.memory_space<vmem>>, %arg3: memref<128x32xf32, #tpu.memory_space<vmem>>, %arg4: memref<64x64xbf16, #tpu.memory_space<vmem>>, %arg5: memref<64x64xbf16, #tpu.memory_space<vmem>>, %arg6: memref<1x64xf32, #tpu.memory_space<vmem>>, %arg7: memref<64x32xbf16, #tpu.memory_space<vmem>>, %arg8: memref<1x32xf32, #tpu.memory_space<vmem>>, %arg9: memref<64x32xbf16, #tpu.memory_space<vmem>>, %arg10: memref<1x32xf32, #tpu.memory_space<vmem>>, %arg11: memref<64x10xf32, #tpu.memory_space<vmem>>, %arg12: memref<1x10xf32, #tpu.memory_space<vmem>>, %arg13: memref<128x10xf32, #tpu.memory_space<vmem>>, %arg14: memref<128x32xf32, #tpu.memory_space<vmem>>) attributes {dimension_semantics = [#tpu.dimension_semantics<parallel>], iteration_bounds = array<i64: 2>, scalar_prefetch = 0 : i64, scratch_operands = 0 : i64, tpu.core_type = #tpu.core_type<tc>, window_params = [{transform_indices = @transform_0, window_bounds = array<i64: 128, 64>}, {transform_indices = @transform_1, window_bounds = array<i64: 128, 64>}, {transform_indices = @transform_2, window_bounds = array<i64: 128, 32>}, {pipeline_mode = #tpu.pipeline_mode<synchronous>, transform_indices = @transform_3, window_bounds = array<i64: 64, 64>}, {pipeline_mode = #tpu.pipeline_mode<synchronous>, transform_indices = @transform_4, window_bounds = array<i64: 64, 64>}, {pipeline_mode = #tpu.pipeline_mode<synchronous>, transform_indices = @transform_5, window_bounds = array<i64: 1, 64>}, {pipeline_mode = #tpu.pipeline_mode<synchronous>, transform_indices = @transform_6, window_bounds = array<i64: 64, 32>}, {pipeline_mode = #tpu.pipeline_mode<synchronous>, transform_indices = @transform_7, window_bounds = array<i64: 1, 32>}, {pipeline_mode = #tpu.pipeline_mode<synchronous>, transform_indices = @transform_8, window_bounds = array<i64: 64, 32>}, {pipeline_mode = #tpu.pipeline_mode<synchronous>, transform_indices = @transform_9, window_bounds = array<i64: 1, 32>}, {pipeline_mode = #tpu.pipeline_mode<synchronous>, transform_indices = @transform_10, window_bounds = array<i64: 64, 10>}, {pipeline_mode = #tpu.pipeline_mode<synchronous>, transform_indices = @transform_11, window_bounds = array<i64: 1, 10>}, {transform_indices = @transform_12, window_bounds = array<i64: 128, 10>}, {transform_indices = @transform_13, window_bounds = array<i64: 128, 32>}]} {
    %c0 = arith.constant 0 : index
    %c0_0 = arith.constant 0 : index
    %0 = vector.load %arg1[%c0, %c0_0] : memref<128x64xf32, #tpu.memory_space<vmem>>, vector<128x64xf32>
    %1 = arith.truncf %0 : vector<128x64xf32> to vector<128x64xbf16>
    %c0_1 = arith.constant 0 : index
    %c0_2 = arith.constant 0 : index
    %2 = vector.load %arg2[%c0_1, %c0_2] : memref<128x64xf32, #tpu.memory_space<vmem>>, vector<128x64xf32>
    %3 = arith.truncf %2 : vector<128x64xf32> to vector<128x64xbf16>
    %c0_3 = arith.constant 0 : index
    %c0_4 = arith.constant 0 : index
    %4 = vector.load %arg4[%c0_3, %c0_4] : memref<64x64xbf16, #tpu.memory_space<vmem>>, vector<64x64xbf16>
    %cst = arith.constant dense<0.000000e+00> : vector<128x64xf32>
    %5 = tpu.matmul %1, %4, %cst {dimension_numbers = #tpu.dot_dimension_numbers<[1], [0], [0], [1], [0, 0, 1, 1], [], []>} : vector<128x64xbf16>, vector<64x64xbf16>, vector<128x64xf32> -> vector<128x64xf32>
    %c0_5 = arith.constant 0 : index
    %c0_6 = arith.constant 0 : index
    %6 = vector.load %arg5[%c0_5, %c0_6] : memref<64x64xbf16, #tpu.memory_space<vmem>>, vector<64x64xbf16>
    %cst_7 = arith.constant dense<0.000000e+00> : vector<128x64xf32>
    %7 = tpu.matmul %3, %6, %cst_7 {dimension_numbers = #tpu.dot_dimension_numbers<[1], [0], [0], [1], [0, 0, 1, 1], [], []>} : vector<128x64xbf16>, vector<64x64xbf16>, vector<128x64xf32> -> vector<128x64xf32>
    %8 = arith.addf %5, %7 : vector<128x64xf32>
    %c0_8 = arith.constant 0 : index
    %c0_9 = arith.constant 0 : index
    %9 = vector.load %arg6[%c0_8, %c0_9] : memref<1x64xf32, #tpu.memory_space<vmem>>, vector<1x64xf32>
    %10 = vector.broadcast %9 : vector<1x64xf32> to vector<128x64xf32>
    %11 = arith.addf %8, %10 : vector<128x64xf32>
    %12 = math.tanh %11 : vector<128x64xf32>
    %13 = arith.truncf %12 : vector<128x64xf32> to vector<128x64xbf16>
    %c0_10 = arith.constant 0 : index
    %c0_11 = arith.constant 0 : index
    %14 = vector.load %arg7[%c0_10, %c0_11] : memref<64x32xbf16, #tpu.memory_space<vmem>>, vector<64x32xbf16>
    %cst_12 = arith.constant dense<0.000000e+00> : vector<128x32xf32>
    %15 = tpu.matmul %13, %14, %cst_12 {dimension_numbers = #tpu.dot_dimension_numbers<[1], [0], [0], [1], [0, 0, 1, 1], [], []>} : vector<128x64xbf16>, vector<64x32xbf16>, vector<128x32xf32> -> vector<128x32xf32>
    %c0_13 = arith.constant 0 : index
    %c0_14 = arith.constant 0 : index
    %16 = vector.load %arg8[%c0_13, %c0_14] : memref<1x32xf32, #tpu.memory_space<vmem>>, vector<1x32xf32>
    %17 = vector.broadcast %16 : vector<1x32xf32> to vector<128x32xf32>
    %18 = arith.addf %15, %17 : vector<128x32xf32>
    %c0_15 = arith.constant 0 : index
    %c0_16 = arith.constant 0 : index
    %19 = vector.load %arg9[%c0_15, %c0_16] : memref<64x32xbf16, #tpu.memory_space<vmem>>, vector<64x32xbf16>
    %cst_17 = arith.constant dense<0.000000e+00> : vector<128x32xf32>
    %20 = tpu.matmul %13, %19, %cst_17 {dimension_numbers = #tpu.dot_dimension_numbers<[1], [0], [0], [1], [0, 0, 1, 1], [], []>} : vector<128x64xbf16>, vector<64x32xbf16>, vector<128x32xf32> -> vector<128x32xf32>
    %c0_18 = arith.constant 0 : index
    %c0_19 = arith.constant 0 : index
    %21 = vector.load %arg10[%c0_18, %c0_19] : memref<1x32xf32, #tpu.memory_space<vmem>>, vector<1x32xf32>
    %22 = vector.broadcast %21 : vector<1x32xf32> to vector<128x32xf32>
    %23 = arith.addf %20, %22 : vector<128x32xf32>
    %cst_20 = arith.constant 5.000000e-01 : f32
    %24 = vector.broadcast %cst_20 : f32 to vector<128x32xf32>
    %25 = arith.mulf %24, %23 : vector<128x32xf32>
    %26 = math.exp %25 : vector<128x32xf32>
    %c0_21 = arith.constant 0 : index
    %c0_22 = arith.constant 0 : index
    %27 = vector.load %arg3[%c0_21, %c0_22] : memref<128x32xf32, #tpu.memory_space<vmem>>, vector<128x32xf32>
    %28 = arith.mulf %26, %27 : vector<128x32xf32>
    %29 = arith.addf %18, %28 : vector<128x32xf32>
    %c0_23 = arith.constant 0 : index
    %c0_24 = arith.constant 0 : index
    %30 = vector.load %arg14[%c0_23, %c0_24] : memref<128x32xf32, #tpu.memory_space<vmem>>, vector<128x32xf32>
    tpu.vector_store %arg14[%c0_23, %c0_24], %29 {strides = array<i32>} : memref<128x32xf32, #tpu.memory_space<vmem>>, vector<128x32xf32>,
    %31 = arith.mulf %29, %29 : vector<128x32xf32>
    %32 = tpu.concatenate %31, %29 in 1 : vector<128x32xf32>, vector<128x32xf32> -> vector<128x64xf32>
    %c0_25 = arith.constant 0 : index
    %c0_26 = arith.constant 0 : index
    %33 = vector.load %arg11[%c0_25, %c0_26] : memref<64x10xf32, #tpu.memory_space<vmem>>, vector<64x10xf32>
    %cst_27 = arith.constant dense<0.000000e+00> : vector<128x10xf32>
    %34 = tpu.matmul %32, %33, %cst_27 {dimension_numbers = #tpu.dot_dimension_numbers<[1], [0], [0], [1], [0, 0, 1, 1], [], []>} : vector<128x64xf32>, vector<64x10xf32>, vector<128x10xf32> -> vector<128x10xf32>
    %c0_28 = arith.constant 0 : index
    %c0_29 = arith.constant 0 : index
    %35 = vector.load %arg12[%c0_28, %c0_29] : memref<1x10xf32, #tpu.memory_space<vmem>>, vector<1x10xf32>
    %36 = vector.broadcast %35 : vector<1x10xf32> to vector<128x10xf32>
    %37 = arith.addf %34, %36 : vector<128x10xf32>
    %38 = math.exp %37 : vector<128x10xf32>
    %c0_30 = arith.constant 0 : index
    %c0_31 = arith.constant 0 : index
    %39 = vector.load %arg13[%c0_30, %c0_31] : memref<128x10xf32, #tpu.memory_space<vmem>>, vector<128x10xf32>
    tpu.vector_store %arg13[%c0_30, %c0_31], %38 {strides = array<i32>} : memref<128x10xf32, #tpu.memory_space<vmem>>, vector<128x10xf32>,
    return
  }
  func.func @transform_0(%arg0: i32) -> (i32, i32) {
    %c0_i32 = arith.constant 0 : i32
    %c0_i32_0 = arith.constant 0 : i32
    return %arg0, %c0_i32 : i32, i32
  }
  func.func @transform_1(%arg0: i32) -> (i32, i32) {
    %c0_i32 = arith.constant 0 : i32
    %c0_i32_0 = arith.constant 0 : i32
    return %arg0, %c0_i32 : i32, i32
  }
  func.func @transform_2(%arg0: i32) -> (i32, i32) {
    %c0_i32 = arith.constant 0 : i32
    %c0_i32_0 = arith.constant 0 : i32
    return %arg0, %c0_i32 : i32, i32
  }
  func.func @transform_3(%arg0: i32) -> (i32, i32) {
    %c0_i32 = arith.constant 0 : i32
    %c0_i32_0 = arith.constant 0 : i32
    %c0_i32_1 = arith.constant 0 : i32
    return %c0_i32, %c0_i32_0 : i32, i32
  }
  func.func @transform_4(%arg0: i32) -> (i32, i32) {
    %c0_i32 = arith.constant 0 : i32
    %c0_i32_0 = arith.constant 0 : i32
    %c0_i32_1 = arith.constant 0 : i32
    return %c0_i32, %c0_i32_0 : i32, i32
  }
  func.func @transform_5(%arg0: i32) -> (i32, i32) {
    %c0_i32 = arith.constant 0 : i32
    %c0_i32_0 = arith.constant 0 : i32
    %c0_i32_1 = arith.constant 0 : i32
    return %c0_i32, %c0_i32_0 : i32, i32
  }
  func.func @transform_6(%arg0: i32) -> (i32, i32) {
    %c0_i32 = arith.constant 0 : i32
    %c0_i32_0 = arith.constant 0 : i32
    %c0_i32_1 = arith.constant 0 : i32
    return %c0_i32, %c0_i32_0 : i32, i32
  }
  func.func @transform_7(%arg0: i32) -> (i32, i32) {
    %c0_i32 = arith.constant 0 : i32
    %c0_i32_0 = arith.constant 0 : i32
    %c0_i32_1 = arith.constant 0 : i32
    return %c0_i32, %c0_i32_0 : i32, i32
  }
  func.func @transform_8(%arg0: i32) -> (i32, i32) {
    %c0_i32 = arith.constant 0 : i32
    %c0_i32_0 = arith.constant 0 : i32
    %c0_i32_1 = arith.constant 0 : i32
    return %c0_i32, %c0_i32_0 : i32, i32
  }
  func.func @transform_9(%arg0: i32) -> (i32, i32) {
    %c0_i32 = arith.constant 0 : i32
    %c0_i32_0 = arith.constant 0 : i32
    %c0_i32_1 = arith.constant 0 : i32
    return %c0_i32, %c0_i32_0 : i32, i32
  }
  func.func @transform_10(%arg0: i32) -> (i32, i32) {
    %c0_i32 = arith.constant 0 : i32
    %c0_i32_0 = arith.constant 0 : i32
    %c0_i32_1 = arith.constant 0 : i32
    return %c0_i32, %c0_i32_0 : i32, i32
  }
  func.func @transform_11(%arg0: i32) -> (i32, i32) {
    %c0_i32 = arith.constant 0 : i32
    %c0_i32_0 = arith.constant 0 : i32
    %c0_i32_1 = arith.constant 0 : i32
    return %c0_i32, %c0_i32_0 : i32, i32
  }
  func.func @transform_12(%arg0: i32) -> (i32, i32) {
    %c0_i32 = arith.constant 0 : i32
    %c0_i32_0 = arith.constant 0 : i32
    return %arg0, %c0_i32 : i32, i32
  }
  func.func @transform_13(%arg0: i32) -> (i32, i32) {
    %c0_i32 = arith.constant 0 : i32
    %c0_i32_0 = arith.constant 0 : i32
    return %arg0, %c0_i32 : i32, i32
  }
}

</mosaic_0001>

<llo_original>
// kernel: tpu_custom_call.1
$region0: #{tpu_custom_call.1}
  #allocation0 [shape = 'u32[]', space=smem, size = 0x4, offset = 0x4, fixed_abs, tag = 'smem constant byte address 0x4 - core index']
  #allocation1 [shape = 'u32[144,128]{1,0:T(1,128)}', space=vmem, size = 0x12000, scoped, tag = 'internal scratch']
  %s0 = inlined_call_operand.vmem [shape: f32[256,64], index: 0, kind: input, shape index: {}]
  %s1 = inlined_call_operand.vmem [shape: f32[256,64], index: 1, kind: input, shape index: {}]
  %s2 = inlined_call_operand.vmem [shape: f32[256,32], index: 2, kind: input, shape index: {}]
  %s3 = inlined_call_operand.vmem [shape: bf16[64,64], index: 3, kind: input, shape index: {}]
  %s4 = inlined_call_operand.vmem [shape: bf16[64,64], index: 4, kind: input, shape index: {}]
  %s5 = inlined_call_operand.vmem [shape: f32[1,64], index: 5, kind: input, shape index: {}]
  %s6 = inlined_call_operand.vmem [shape: bf16[64,32], index: 6, kind: input, shape index: {}]
  %s7 = inlined_call_operand.vmem [shape: f32[1,32], index: 7, kind: input, shape index: {}]
  %s8 = inlined_call_operand.vmem [shape: bf16[64,32], index: 8, kind: input, shape index: {}]
  %s9 = inlined_call_operand.vmem [shape: f32[1,32], index: 9, kind: input, shape index: {}]
  %s10 = inlined_call_operand.vmem [shape: f32[64,10], index: 10, kind: input, shape index: {}]
  %s11 = inlined_call_operand.vmem [shape: f32[1,10], index: 11, kind: input, shape index: {}]
  %s12 = inlined_call_operand.vmem [shape: f32[256,10], index: 12, kind: output, shape index: {0}]
  %s13 = inlined_call_operand.vmem [shape: f32[256,32], index: 13, kind: output, shape index: {1}]
  %14 = xla_tuple %s12, %s13
  %s15 = sld [smem:[#allocation0]]
  $region89: #{tpu_custom_call.1} parent=0
    _
  %s17 = ssub.s32 1, %s15
  %s18 = scalar_select 0, %s17, %s15
  loop: start=0, step=1, limit=4
  $region2: #{tpu_custom_call.1} parent=0 // loop_pre_header
    _
  $region3: #{tpu_custom_call.1} parent=0 // loop_header
    %s20 = sphi 0, %s24
    %p21 = scmp.ge.s32.totalorder %s20, 4
    %s30 = sphi 0, %s32
    %s33 = sphi 0, %s30
    %s34 = sphi 0, %s33
    %s50 = sphi 0, %s34
    %s56 = sphi 0, %s58
    %s59 = sphi 0, %s56
    %s60 = sphi 0, %s59
    %s76 = sphi 0, %s60
    %s82 = sphi 0, %s84
    %s85 = sphi 0, %s82
    %s86 = sphi 0, %s85
    %s102 = sphi 0, %s86
    %s106 = sphi 0, %s106
    %s108 = sphi 0, %s106
    %s109 = sphi 0, %s108
    %s123 = sphi 0, %s109
    %s127 = sphi 0, %s127
    %s129 = sphi 0, %s127
    %s130 = sphi 0, %s129
    %s144 = sphi 0, %s130
    %s148 = sphi 0, %s148
    %s150 = sphi 0, %s148
    %s151 = sphi 0, %s150
    %s165 = sphi 0, %s151
    %s169 = sphi 0, %s169
    %s171 = sphi 0, %s169
    %s172 = sphi 0, %s171
    %s186 = sphi 0, %s172
    %s190 = sphi 0, %s190
    %s192 = sphi 0, %s190
    %s193 = sphi 0, %s192
    %s207 = sphi 0, %s193
    %s211 = sphi 0, %s211
    %s213 = sphi 0, %s211
    %s214 = sphi 0, %s213
    %s228 = sphi 0, %s214
    %s232 = sphi 0, %s232
    %s234 = sphi 0, %s232
    %s235 = sphi 0, %s234
    %s249 = sphi 0, %s235
    %s253 = sphi 0, %s253
    %s255 = sphi 0, %s253
    %s256 = sphi 0, %s255
    %s270 = sphi 0, %s256
    %s274 = sphi 0, %s274
    %s276 = sphi 0, %s274
    %s277 = sphi 0, %s276
    %s291 = sphi 0, %s277
    %s297 = sphi 0, %s299
    %s300 = sphi 0, %s297
    %s301 = sphi 0, %s300
    %s317 = sphi 0, %s301
    %s323 = sphi 0, %s325
    %s326 = sphi 0, %s323
    %s327 = sphi 0, %s326
    %s343 = sphi 0, %s327
  $region4: #{tpu_custom_call.1} parent=0 // loop_header_branch
    %23 = sbr.rel (%p21) target = $region8
  $region5: #{tpu_custom_call.1} parent=0 // loop_body
    %s25 = ssub.s32 %s20, 1
    %s26 = ssub.s32 %s20, 2
    %s27 = sadd.s32 %s20, 1
    %s28 = ssub.s32 %s20, %s27
    %p29 = scmp.eq.s32.totalorder %s28, 0
    %s31 = sadd.s32 %s30, 1
    %s32 = scalar_select %p29, %s30, %s31
    %p35 = pneg %p29
    %p36 = scmp.eq.s32.totalorder %s20, 1
    %p37 = por %p35, %p36
    %p38 = scmp.ne.s32.totalorder %s30, %s33
    %p39 = scmp.eq.s32.totalorder %s20, 0
    %p40 = por %p38, %p39
    %p41 = scmp.ne.s32.totalorder %s30, %s33
    %p42 = scmp.eq.s32.totalorder %s25, 1
    %p43 = por %p41, %p42
    %p44 = scmp.ne.s32.totalorder %s33, %s34
    %p45 = scmp.eq.s32.totalorder %s25, 0
    %p46 = por %p44, %p45
    %p47 = scmp.ne.s32.totalorder %s33, %s34
    %p48 = scmp.eq.s32.totalorder %s26, 1
    %p49 = por %p47, %p48
    %p51 = scmp.ne.s32.totalorder %s34, %s50
    %p52 = scmp.eq.s32.totalorder %s26, 0
    %p53 = por %p51, %p52
    %s54 = ssub.s32 %s20, %s27
    %p55 = scmp.eq.s32.totalorder %s54, 0
    %s57 = sadd.s32 %s56, 1
    %s58 = scalar_select %p55, %s56, %s57
    %p61 = pneg %p55
    %p62 = scmp.eq.s32.totalorder %s20, 1
    %p63 = por %p61, %p62
    %p64 = scmp.ne.s32.totalorder %s56, %s59
    %p65 = scmp.eq.s32.totalorder %s20, 0
    %p66 = por %p64, %p65
    %p67 = scmp.ne.s32.totalorder %s56, %s59
    %p68 = scmp.eq.s32.totalorder %s25, 1
    %p69 = por %p67, %p68
    %p70 = scmp.ne.s32.totalorder %s59, %s60
    %p71 = scmp.eq.s32.totalorder %s25, 0
    %p72 = por %p70, %p71
    %p73 = scmp.ne.s32.totalorder %s59, %s60
    %p74 = scmp.eq.s32.totalorder %s26, 1
    %p75 = por %p73, %p74
    %p77 = scmp.ne.s32.totalorder %s60, %s76
    %p78 = scmp.eq.s32.totalorder %s26, 0
    %p79 = por %p77, %p78
    %s80 = ssub.s32 %s20, %s27
    %p81 = scmp.eq.s32.totalorder %s80, 0
    %s83 = sadd.s32 %s82, 1
    %s84 = scalar_select %p81, %s82, %s83
    %p87 = pneg %p81
    %p88 = scmp.eq.s32.totalorder %s20, 1
    %p89 = por %p87, %p88
    %p90 = scmp.ne.s32.totalorder %s82, %s85
    %p91 = scmp.eq.s32.totalorder %s20, 0
    %p92 = por %p90, %p91
    %p93 = scmp.ne.s32.totalorder %s82, %s85
    %p94 = scmp.eq.s32.totalorder %s25, 1
    %p95 = por %p93, %p94
    %p96 = scmp.ne.s32.totalorder %s85, %s86
    %p97 = scmp.eq.s32.totalorder %s25, 0
    %p98 = por %p96, %p97
    %p99 = scmp.ne.s32.totalorder %s85, %s86
    %p100 = scmp.eq.s32.totalorder %s26, 1
    %p101 = por %p99, %p100
    %p103 = scmp.ne.s32.totalorder %s86, %s102
    %p104 = scmp.eq.s32.totalorder %s26, 0
    %p105 = por %p103, %p104
    %s107 = sadd.s32 %s106, 1
    %p110 = scmp.eq.s32.totalorder %s20, 1
    %p111 = scmp.ne.s32.totalorder %s106, %s108
    %p112 = scmp.eq.s32.totalorder %s20, 0
    %p113 = por %p111, %p112
    %p114 = scmp.ne.s32.totalorder %s106, %s108
    %p115 = scmp.eq.s32.totalorder %s25, 1
    %p116 = por %p114, %p115
    %p117 = scmp.ne.s32.totalorder %s108, %s109
    %p118 = scmp.eq.s32.totalorder %s25, 0
    %p119 = por %p117, %p118
    %p120 = scmp.ne.s32.totalorder %s108, %s109
    %p121 = scmp.eq.s32.totalorder %s26, 1
    %p122 = por %p120, %p121
    %p124 = scmp.ne.s32.totalorder %s109, %s123
    %p125 = scmp.eq.s32.totalorder %s26, 0
    %p126 = por %p124, %p125
    %s128 = sadd.s32 %s127, 1
    %p131 = scmp.eq.s32.totalorder %s20, 1
    %p132 = scmp.ne.s32.totalorder %s127, %s129
    %p133 = scmp.eq.s32.totalorder %s20, 0
    %p134 = por %p132, %p133
    %p135 = scmp.ne.s32.totalorder %s127, %s129
    %p136 = scmp.eq.s32.totalorder %s25, 1
    %p137 = por %p135, %p136
    %p138 = scmp.ne.s32.totalorder %s129, %s130
    %p139 = scmp.eq.s32.totalorder %s25, 0
    %p140 = por %p138, %p139
    %p141 = scmp.ne.s32.totalorder %s129, %s130
    %p142 = scmp.eq.s32.totalorder %s26, 1
    %p143 = por %p141, %p142
    %p145 = scmp.ne.s32.totalorder %s130, %s144
    %p146 = scmp.eq.s32.totalorder %s26, 0
    %p147 = por %p145, %p146
    %s149 = sadd.s32 %s148, 1
    %p152 = scmp.eq.s32.totalorder %s20, 1
    %p153 = scmp.ne.s32.totalorder %s148, %s150
    %p154 = scmp.eq.s32.totalorder %s20, 0
    %p155 = por %p153, %p154
    %p156 = scmp.ne.s32.totalorder %s148, %s150
    %p157 = scmp.eq.s32.totalorder %s25, 1
    %p158 = por %p156, %p157
    %p159 = scmp.ne.s32.totalorder %s150, %s151
    %p160 = scmp.eq.s32.totalorder %s25, 0
    %p161 = por %p159, %p160
    %p162 = scmp.ne.s32.totalorder %s150, %s151
    %p163 = scmp.eq.s32.totalorder %s26, 1
    %p164 = por %p162, %p163
    %p166 = scmp.ne.s32.totalorder %s151, %s165
    %p167 = scmp.eq.s32.totalorder %s26, 0
    %p168 = por %p166, %p167
    %s170 = sadd.s32 %s169, 1
    %p173 = scmp.eq.s32.totalorder %s20, 1
    %p174 = scmp.ne.s32.totalorder %s169, %s171
    %p175 = scmp.eq.s32.totalorder %s20, 0
    %p176 = por %p174, %p175
    %p177 = scmp.ne.s32.totalorder %s169, %s171
    %p178 = scmp.eq.s32.totalorder %s25, 1
    %p179 = por %p177, %p178
    %p180 = scmp.ne.s32.totalorder %s171, %s172
    %p181 = scmp.eq.s32.totalorder %s25, 0
    %p182 = por %p180, %p181
    %p183 = scmp.ne.s32.totalorder %s171, %s172
    %p184 = scmp.eq.s32.totalorder %s26, 1
    %p185 = por %p183, %p184
    %p187 = scmp.ne.s32.totalorder %s172, %s186
    %p188 = scmp.eq.s32.totalorder %s26, 0
    %p189 = por %p187, %p188
    %s191 = sadd.s32 %s190, 1
    %p194 = scmp.eq.s32.totalorder %s20, 1
    %p195 = scmp.ne.s32.totalorder %s190, %s192
    %p196 = scmp.eq.s32.totalorder %s20, 0
    %p197 = por %p195, %p196
    %p198 = scmp.ne.s32.totalorder %s190, %s192
    %p199 = scmp.eq.s32.totalorder %s25, 1
    %p200 = por %p198, %p199
    %p201 = scmp.ne.s32.totalorder %s192, %s193
    %p202 = scmp.eq.s32.totalorder %s25, 0
    %p203 = por %p201, %p202
    %p204 = scmp.ne.s32.totalorder %s192, %s193
    %p205 = scmp.eq.s32.totalorder %s26, 1
    %p206 = por %p204, %p205
    %p208 = scmp.ne.s32.totalorder %s193, %s207
    %p209 = scmp.eq.s32.totalorder %s26, 0
    %p210 = por %p208, %p209
    %s212 = sadd.s32 %s211, 1
    %p215 = scmp.eq.s32.totalorder %s20, 1
    %p216 = scmp.ne.s32.totalorder %s211, %s213
    %p217 = scmp.eq.s32.totalorder %s20, 0
    %p218 = por %p216, %p217
    %p219 = scmp.ne.s32.totalorder %s211, %s213
    %p220 = scmp.eq.s32.totalorder %s25, 1
    %p221 = por %p219, %p220
    %p222 = scmp.ne.s32.totalorder %s213, %s214
    %p223 = scmp.eq.s32.totalorder %s25, 0
    %p224 = por %p222, %p223
    %p225 = scmp.ne.s32.totalorder %s213, %s214
    %p226 = scmp.eq.s32.totalorder %s26, 1
    %p227 = por %p225, %p226
    %p229 = scmp.ne.s32.totalorder %s214, %s228
    %p230 = scmp.eq.s32.totalorder %s26, 0
    %p231 = por %p229, %p230
    %s233 = sadd.s32 %s232, 1
    %p236 = scmp.eq.s32.totalorder %s20, 1
    %p237 = scmp.ne.s32.totalorder %s232, %s234
    %p238 = scmp.eq.s32.totalorder %s20, 0
    %p239 = por %p237, %p238
    %p240 = scmp.ne.s32.totalorder %s232, %s234
    %p241 = scmp.eq.s32.totalorder %s25, 1
    %p242 = por %p240, %p241
    %p243 = scmp.ne.s32.totalorder %s234, %s235
    %p244 = scmp.eq.s32.totalorder %s25, 0
    %p245 = por %p243, %p244
    %p246 = scmp.ne.s32.totalorder %s234, %s235
    %p247 = scmp.eq.s32.totalorder %s26, 1
    %p248 = por %p246, %p247
    %p250 = scmp.ne.s32.totalorder %s235, %s249
    %p251 = scmp.eq.s32.totalorder %s26, 0
    %p252 = por %p250, %p251
    %s254 = sadd.s32 %s253, 1
    %p257 = scmp.eq.s32.totalorder %s20, 1
    %p258 = scmp.ne.s32.totalorder %s253, %s255
    %p259 = scmp.eq.s32.totalorder %s20, 0
    %p260 = por %p258, %p259
    %p261 = scmp.ne.s32.totalorder %s253, %s255
    %p262 = scmp.eq.s32.totalorder %s25, 1
    %p263 = por %p261, %p262
    %p264 = scmp.ne.s32.totalorder %s255, %s256
    %p265 = scmp.eq.s32.totalorder %s25, 0
    %p266 = por %p264, %p265
    %p267 = scmp.ne.s32.totalorder %s255, %s256
    %p268 = scmp.eq.s32.totalorder %s26, 1
    %p269 = por %p267, %p268
    %p271 = scmp.ne.s32.totalorder %s256, %s270
    %p272 = scmp.eq.s32.totalorder %s26, 0
    %p273 = por %p271, %p272
    %s275 = sadd.s32 %s274, 1
    %p278 = scmp.eq.s32.totalorder %s20, 1
    %p279 = scmp.ne.s32.totalorder %s274, %s276
    %p280 = scmp.eq.s32.totalorder %s20, 0
    %p281 = por %p279, %p280
    %p282 = scmp.ne.s32.totalorder %s274, %s276
    %p283 = scmp.eq.s32.totalorder %s25, 1
    %p284 = por %p282, %p283
    %p285 = scmp.ne.s32.totalorder %s276, %s277
    %p286 = scmp.eq.s32.totalorder %s25, 0
    %p287 = por %p285, %p286
    %p288 = scmp.ne.s32.totalorder %s276, %s277
    %p289 = scmp.eq.s32.totalorder %s26, 1
    %p290 = por %p288, %p289
    %p292 = scmp.ne.s32.totalorder %s277, %s291
    %p293 = scmp.eq.s32.totalorder %s26, 0
    %p294 = por %p292, %p293
    %s295 = ssub.s32 %s20, %s27
    %p296 = scmp.eq.s32.totalorder %s295, 0
    %s298 = sadd.s32 %s297, 1
    %s299 = scalar_select %p296, %s297, %s298
    %p302 = pneg %p296
    %p303 = scmp.eq.s32.totalorder %s20, 1
    %p304 = por %p302, %p303
    %p305 = scmp.ne.s32.totalorder %s297, %s300
    %p306 = scmp.eq.s32.totalorder %s20, 0
    %p307 = por %p305, %p306
    %p308 = scmp.ne.s32.totalorder %s297, %s300
    %p309 = scmp.eq.s32.totalorder %s25, 1
    %p310 = por %p308, %p309
    %p311 = scmp.ne.s32.totalorder %s300, %s301
    %p312 = scmp.eq.s32.totalorder %s25, 0
    %p313 = por %p311, %p312
    %p314 = scmp.ne.s32.totalorder %s300, %s301
    %p315 = scmp.eq.s32.totalorder %s26, 1
    %p316 = por %p314, %p315
    %p318 = scmp.ne.s32.totalorder %s301, %s317
    %p319 = scmp.eq.s32.totalorder %s26, 0
    %p320 = por %p318, %p319
    %s321 = ssub.s32 %s20, %s27
    %p322 = scmp.eq.s32.totalorder %s321, 0
    %s324 = sadd.s32 %s323, 1
    %s325 = scalar_select %p322, %s323, %s324
    %p328 = pneg %p322
    %p329 = scmp.eq.s32.totalorder %s20, 1
    %p330 = por %p328, %p329
    %p331 = scmp.ne.s32.totalorder %s323, %s326
    %p332 = scmp.eq.s32.totalorder %s20, 0
    %p333 = por %p331, %p332
    %p334 = scmp.ne.s32.totalorder %s323, %s326
    %p335 = scmp.eq.s32.totalorder %s25, 1
    %p336 = por %p334, %p335
    %p337 = scmp.ne.s32.totalorder %s326, %s327
    %p338 = scmp.eq.s32.totalorder %s25, 0
    %p339 = por %p337, %p338
    %p340 = scmp.ne.s32.totalorder %s326, %s327
    %p341 = scmp.eq.s32.totalorder %s26, 1
    %p342 = por %p340, %p341
    %p344 = scmp.ne.s32.totalorder %s327, %s343
    %p345 = scmp.eq.s32.totalorder %s26, 0
    %p346 = por %p344, %p345
    %p347 = scmp.le.s32.totalorder 1, %s20
    %p348 = scmp.lt.s32.totalorder %s20, 3
    %p349 = pnand %p347, %p348
    %p350 = pneg %p349
    // Predicated region
    $region9: #{tpu_custom_call.1} parent=5 // pred_check
      _
    $region10: #{tpu_custom_call.1} parent=5 // pred_check_branch
      %352 = sbr.rel (%p349) target = $region12
    $region11: #{tpu_custom_call.1} parent=5 // pred_region
      %s353 = ssub.s32 %s20, 1
      // Predicated region
      $region13: #{tpu_custom_call.1} parent=11 // pred_check
        %p354 = pneg %p119
      $region14: #{tpu_custom_call.1} parent=11 // pred_check_branch
        %356 = sbr.rel (%p354) target = $region16
      $region15: #{tpu_custom_call.1} parent=11 // pred_region
        _
      $region16: #{tpu_custom_call.1} parent=11 // pred_fallthru
        _
      // Predicated region
      $region17: #{tpu_custom_call.1} parent=11 // pred_check
        %p357 = pneg %p140
      $region18: #{tpu_custom_call.1} parent=11 // pred_check_branch
        %359 = sbr.rel (%p357) target = $region20
      $region19: #{tpu_custom_call.1} parent=11 // pred_region
        _
      $region20: #{tpu_custom_call.1} parent=11 // pred_fallthru
        _
      // Predicated region
      $region21: #{tpu_custom_call.1} parent=11 // pred_check
        %p360 = pneg %p161
      $region22: #{tpu_custom_call.1} parent=11 // pred_check_branch
        %362 = sbr.rel (%p360) target = $region24
      $region23: #{tpu_custom_call.1} parent=11 // pred_region
        _
      $region24: #{tpu_custom_call.1} parent=11 // pred_fallthru
        _
      // Predicated region
      $region25: #{tpu_custom_call.1} parent=11 // pred_check
        %p363 = pneg %p182
      $region26: #{tpu_custom_call.1} parent=11 // pred_check_branch
        %365 = sbr.rel (%p363) target = $region28
      $region27: #{tpu_custom_call.1} parent=11 // pred_region
        _
      $region28: #{tpu_custom_call.1} parent=11 // pred_fallthru
        _
      // Predicated region
      $region29: #{tpu_custom_call.1} parent=11 // pred_check
        %p366 = pneg %p203
      $region30: #{tpu_custom_call.1} parent=11 // pred_check_branch
        %368 = sbr.rel (%p366) target = $region32
      $region31: #{tpu_custom_call.1} parent=11 // pred_region
        _
      $region32: #{tpu_custom_call.1} parent=11 // pred_fallthru
        _
      // Predicated region
      $region33: #{tpu_custom_call.1} parent=11 // pred_check
        %p369 = pneg %p224
      $region34: #{tpu_custom_call.1} parent=11 // pred_check_branch
        %371 = sbr.rel (%p369) target = $region36
      $region35: #{tpu_custom_call.1} parent=11 // pred_region
        _
      $region36: #{tpu_custom_call.1} parent=11 // pred_fallthru
        _
      // Predicated region
      $region37: #{tpu_custom_call.1} parent=11 // pred_check
        %p372 = pneg %p245
      $region38: #{tpu_custom_call.1} parent=11 // pred_check_branch
        %374 = sbr.rel (%p372) target = $region40
      $region39: #{tpu_custom_call.1} parent=11 // pred_region
        _
      $region40: #{tpu_custom_call.1} parent=11 // pred_fallthru
        _
      // Predicated region
      $region41: #{tpu_custom_call.1} parent=11 // pred_check
        %p375 = pneg %p266
      $region42: #{tpu_custom_call.1} parent=11 // pred_check_branch
        %377 = sbr.rel (%p375) target = $region44
      $region43: #{tpu_custom_call.1} parent=11 // pred_region
        _
      $region44: #{tpu_custom_call.1} parent=11 // pred_fallthru
        _
      // Predicated region
      $region45: #{tpu_custom_call.1} parent=11 // pred_check
        %p378 = pneg %p287
      $region46: #{tpu_custom_call.1} parent=11 // pred_check_branch
        %380 = sbr.rel (%p378) target = $region48
      $region47: #{tpu_custom_call.1} parent=11 // pred_region
        _
      $region48: #{tpu_custom_call.1} parent=11 // pred_fallthru
        _
    $region12: #{tpu_custom_call.1} parent=5 // pred_fallthru
      _
    %p381 = scmp.lt.s32.totalorder %s20, 2
    // Predicated region
    $region49: #{tpu_custom_call.1} parent=5 // pred_check
      %p382 = pneg %p381
    $region50: #{tpu_custom_call.1} parent=5 // pred_check_branch
      %384 = sbr.rel (%p382) target = $region52
    $region51: #{tpu_custom_call.1} parent=5 // pred_region
      // Predicated region
      $region53: #{tpu_custom_call.1} parent=51 // pred_check
        %p385 = pneg %p40
      $region54: #{tpu_custom_call.1} parent=51 // pred_check_branch
        %387 = sbr.rel (%p385) target = $region56
      $region55: #{tpu_custom_call.1} parent=51 // pred_region
        %s388 = smul.u32 16, %s20
        %p389 = scmp.lt.s32.totalorder %s388, 31
        %s390 = scalar_select %p389, %s388, 31
        %s391 = smul.addr %s390, 8
        %s392 = scalar_lea.vmem %s0, %s391
        %s393 = smul.u32 16, %s20
      $region56: #{tpu_custom_call.1} parent=51 // pred_fallthru
        _
      // Predicated region
      $region57: #{tpu_custom_call.1} parent=51 // pred_check
        %p394 = pneg %p66
      $region58: #{tpu_custom_call.1} parent=51 // pred_check_branch
        %396 = sbr.rel (%p394) target = $region60
      $region59: #{tpu_custom_call.1} parent=51 // pred_region
        %s397 = smul.u32 16, %s20
        %p398 = scmp.lt.s32.totalorder %s397, 31
        %s399 = scalar_select %p398, %s397, 31
        %s400 = smul.addr %s399, 8
        %s401 = scalar_lea.vmem %s1, %s400
        %s402 = smul.u32 16, %s20
      $region60: #{tpu_custom_call.1} parent=51 // pred_fallthru
        _
      // Predicated region
      $region61: #{tpu_custom_call.1} parent=51 // pred_check
        %p403 = pneg %p92
      $region62: #{tpu_custom_call.1} parent=51 // pred_check_branch
        %405 = sbr.rel (%p403) target = $region64
      $region63: #{tpu_custom_call.1} parent=51 // pred_region
        %s406 = smul.u32 16, %s20
        %p407 = scmp.lt.s32.totalorder %s406, 31
        %s408 = scalar_select %p407, %s406, 31
        %s409 = smul.addr %s408, 8
        %s410 = scalar_lea.vmem %s2, %s409
        %s411 = smul.u32 16, %s20
      $region64: #{tpu_custom_call.1} parent=51 // pred_fallthru
        _
    $region52: #{tpu_custom_call.1} parent=5 // pred_fallthru
      _
    %p412 = scmp.le.s32.totalorder 1, %s20
    %p413 = scmp.lt.s32.totalorder %s20, 3
    %p414 = pnand %p412, %p413
    %p415 = pneg %p414
    // Predicated region
    $region65: #{tpu_custom_call.1} parent=5 // pred_check
      _
    $region66: #{tpu_custom_call.1} parent=5 // pred_check_branch
      %417 = sbr.rel (%p414) target = $region68
    $region67: #{tpu_custom_call.1} parent=5 // pred_region
      %s418 = ssub.s32 %s20, 1
      %s419 = smul.u32 16, %s25
      %p420 = scmp.lt.s32.totalorder %s419, 31
      %s421 = scalar_select %p420, %s419, 31
      %s422 = smul.addr %s421, 8
      %s423 = scalar_lea.vmem %s0, %s422
      %p424 = pneg %p46
      %p425 = pneg %p43
      %s426 = smul.u32 16, %s25
      %p427 = scmp.lt.s32.totalorder %s426, 31
      %s428 = scalar_select %p427, %s426, 31
      %s429 = smul.addr %s428, 8
      %s430 = scalar_lea.vmem %s1, %s429
      %p431 = pneg %p72
      %p432 = pneg %p69
      %s433 = smul.u32 16, %s25
      %p434 = scmp.lt.s32.totalorder %s433, 31
      %s435 = scalar_select %p434, %s433, 31
      %s436 = smul.addr %s435, 8
      %s437 = scalar_lea.vmem %s2, %s436
      %p438 = pneg %p98
      %p439 = pneg %p95
      %p440 = pneg %p119
      %p441 = pneg %p116
      %p442 = pneg %p140
      %p443 = pneg %p137
      %p444 = pneg %p161
      %p445 = pneg %p158
      %p446 = pneg %p182
      %p447 = pneg %p179
      %p448 = pneg %p203
      %p449 = pneg %p200
      %p450 = pneg %p224
      %p451 = pneg %p221
      %p452 = pneg %p245
      %p453 = pneg %p242
      %p454 = pneg %p266
      %p455 = pneg %p263
      %p456 = pneg %p287
      %p457 = pneg %p284
      %p458 = pneg %p313
      %p459 = pneg %p310
      %s460 = smul.u32 16, %s25
      %p461 = scmp.lt.s32.totalorder %s460, 31
      %s462 = scalar_select %p461, %s460, 31
      %s463 = smul.addr %s462, 8
      %s464 = scalar_lea.vmem %s12, %s463
      %p465 = pneg %p339
      %p466 = pneg %p336
      %s467 = smul.u32 16, %s25
      %p468 = scmp.lt.s32.totalorder %s467, 31
      %s469 = scalar_select %p468, %s467, 31
      %s470 = smul.addr %s469, 8
      %s471 = scalar_lea.vmem %s13, %s470
      %s472 = smul.u32 16, %s25
      %p473 = scmp.lt.s32.totalorder %s472, 31
      %s474 = scalar_select %p473, %s472, 31
      %s475 = smul.addr %s474, 8
      %s476 = scalar_lea.vmem %s0, %s475
      %s477 = smul.u32 16, %s25
      %s478 = smul.u32 16, %s25
      %p479 = scmp.lt.s32.totalorder %s478, 31
      %s480 = scalar_select %p479, %s478, 31
      %s481 = smul.addr %s480, 8
      %s482 = scalar_lea.vmem %s1, %s481
      %s483 = smul.u32 16, %s25
      %s484 = smul.u32 16, %s25
      %p485 = scmp.lt.s32.totalorder %s484, 31
      %s486 = scalar_select %p485, %s484, 31
      %s487 = smul.addr %s486, 8
      %s488 = scalar_lea.vmem %s2, %s487
      %s489 = smul.u32 16, %s25
      %s490 = smul.u32 16, %s25
      %p491 = scmp.lt.s32.totalorder %s490, 31
      %s492 = scalar_select %p491, %s490, 31
      %s493 = smul.addr %s492, 8
      %s494 = scalar_lea.vmem %s12, %s493
      %s495 = smul.u32 16, %s25
      %s496 = smul.u32 16, %s25
      %p497 = scmp.lt.s32.totalorder %s496, 31
      %s498 = scalar_select %p497, %s496, 31
      %s499 = smul.addr %s498, 8
      %s500 = scalar_lea.vmem %s13, %s499
      %s501 = smul.u32 16, %s25
      %v503 = vld [vmem:[%s476] sm:$0xff]
      %v504 = vld [vmem:[%s476 + $0x8] sm:$0xff]
      %v505 = vld [vmem:[%s476 + $0x10] sm:$0xff]
      %v506 = vld [vmem:[%s476 + $0x18] sm:$0xff]
      %v507 = vld [vmem:[%s476 + $0x20] sm:$0xff]
      %v508 = vld [vmem:[%s476 + $0x28] sm:$0xff]
      %v509 = vld [vmem:[%s476 + $0x30] sm:$0xff]
      %v510 = vld [vmem:[%s476 + $0x38] sm:$0xff]
      %v511 = vld [vmem:[%s476 + $0x40] sm:$0xff]
      %v512 = vld [vmem:[%s476 + $0x48] sm:$0xff]
      %v513 = vld [vmem:[%s476 + $0x50] sm:$0xff]
      %v514 = vld [vmem:[%s476 + $0x58] sm:$0xff]
      %v515 = vld [vmem:[%s476 + $0x60] sm:$0xff]
      %v516 = vld [vmem:[%s476 + $0x68] sm:$0xff]
      %v517 = vld [vmem:[%s476 + $0x70] sm:$0xff]
      %v518 = vld [vmem:[%s476 + $0x78] sm:$0xff]
      %v519 = vpack.c.bf16 %v504, %v503
      %v520 = vpack.c.bf16 %v506, %v505
      %v521 = vpack.c.bf16 %v508, %v507
      %v522 = vpack.c.bf16 %v510, %v509
      %v523 = vpack.c.bf16 %v512, %v511
      %v524 = vpack.c.bf16 %v514, %v513
      %v525 = vpack.c.bf16 %v516, %v515
      %v526 = vpack.c.bf16 %v518, %v517
      %v527 = vld [vmem:[%s482] sm:$0xff]
      %v528 = vld [vmem:[%s482 + $0x8] sm:$0xff]
      %v529 = vld [vmem:[%s482 + $0x10] sm:$0xff]
      %v530 = vld [vmem:[%s482 + $0x18] sm:$0xff]
      %v531 = vld [vmem:[%s482 + $0x20] sm:$0xff]
      %v532 = vld [vmem:[%s482 + $0x28] sm:$0xff]
      %v533 = vld [vmem:[%s482 + $0x30] sm:$0xff]
      %v534 = vld [vmem:[%s482 + $0x38] sm:$0xff]
      %v535 = vld [vmem:[%s482 + $0x40] sm:$0xff]
      %v536 = vld [vmem:[%s482 + $0x48] sm:$0xff]
      %v537 = vld [vmem:[%s482 + $0x50] sm:$0xff]
      %v538 = vld [vmem:[%s482 + $0x58] sm:$0xff]
      %v539 = vld [vmem:[%s482 + $0x60] sm:$0xff]
      %v540 = vld [vmem:[%s482 + $0x68] sm:$0xff]
      %v541 = vld [vmem:[%s482 + $0x70] sm:$0xff]
      %v542 = vld [vmem:[%s482 + $0x78] sm:$0xff]
      %v543 = vpack.c.bf16 %v528, %v527
      %v544 = vpack.c.bf16 %v530, %v529
      %v545 = vpack.c.bf16 %v532, %v531
      %v546 = vpack.c.bf16 %v534, %v533
      %v547 = vpack.c.bf16 %v536, %v535
      %v548 = vpack.c.bf16 %v538, %v537
      %v549 = vpack.c.bf16 %v540, %v539
      %v550 = vpack.c.bf16 %v542, %v541
      %v551 = vld [vmem:[%s3] sm:$0xf]
      %v552 = vld [vmem:[%s3 + $0x4] sm:$0xf]
      %v553 = vld [vmem:[%s3 + $0x8] sm:$0xf]
      %v554 = vld [vmem:[%s3 + $0xc] sm:$0xf]
      %v555 = vld [vmem:[%s3 + $0x10] sm:$0xf]
      %v556 = vld [vmem:[%s3 + $0x14] sm:$0xf]
      %v557 = vld [vmem:[%s3 + $0x18] sm:$0xf]
      %v558 = vld [vmem:[%s3 + $0x1c] sm:$0xf]
      %v559 = vld [vmem:[%s4] sm:$0xf]
      %v560 = vld [vmem:[%s4 + $0x4] sm:$0xf]
      %v561 = vld [vmem:[%s4 + $0x8] sm:$0xf]
      %v562 = vld [vmem:[%s4 + $0xc] sm:$0xf]
      %v563 = vld [vmem:[%s4 + $0x10] sm:$0xf]
      %v564 = vld [vmem:[%s4 + $0x14] sm:$0xf]
      %v565 = vld [vmem:[%s4 + $0x18] sm:$0xf]
      %v566 = vld [vmem:[%s4 + $0x1c] sm:$0xf]
      %v575 = vunpack.c.l.b16 %v559
      %v576 = vunpack.c.l.b16 %v560
      %v577 = vunpack.c.l.b16 %v561
      %v578 = vunpack.c.l.b16 %v562
      %v579 = vunpack.c.l.b16 %v563
      %v580 = vunpack.c.l.b16 %v564
      %v581 = vunpack.c.l.b16 %v565
      %v582 = vunpack.c.l.b16 %v566
      %v583 = vpack.c.b16 %v576, %v575
      %v584 = vpack.c.b16 %v578, %v577
      %v585 = vpack.c.b16 %v580, %v579
      %v586 = vpack.c.b16 %v582, %v581
      %vm591 = vcmask 523264
      %v593 = vsel %vm591, %v543, 0
      %v596 = vsel %vm591, %v544, 0
      %v599 = vsel %vm591, %v545, 0
      %v602 = vsel %vm591, %v546, 0
      %v605 = vsel %vm591, %v547, 0
      %v608 = vsel %vm591, %v548, 0
      %v611 = vsel %vm591, %v549, 0
      %v614 = vsel %vm591, %v550, 0
      %616 = vmatprep.subr.bf16.mxu0 0
      %617 = vmatpush1.bf16.msra.mxu0 0
      %618 = vmatprep.subr.bf16.mxu0 0
      %619 = vmatpush1.bf16.msra.mxu0 0
      %620 = vmatprep.subr.bf16.mxu0 0
      %621 = vmatpush1.bf16.msra.mxu0 0
      %622 = vmatprep.subr.bf16.mxu0 0
      %623 = vmatpush1.bf16.msra.mxu0 0
      %624 = vmatprep.subr.bf16.mxu0 0
      %625 = vmatpush1.bf16.msra.mxu0 %v586
      %626 = vmatprep.subr.bf16.mxu0 0
      %627 = vmatpush1.bf16.msra.mxu0 %v585
      %628 = vmatprep.subr.bf16.mxu0 0
      %629 = vmatpush1.bf16.msra.mxu0 %v584
      %630 = vmatprep.subr.bf16.mxu0 0
      %631 = vmatpush1.bf16.msra.mxu0 %v583
      %632 = vmatprep.subr.bf16.mxu0 0
      %633 = vmatpush2.bf16.msra.mxu0 0
      %634 = vmatprep.subr.bf16.mxu0 0
      %635 = vmatpush2.bf16.msra.mxu0 0
      %636 = vmatprep.subr.bf16.mxu0 0
      %637 = vmatpush2.bf16.msra.mxu0 0
      %638 = vmatprep.subr.bf16.mxu0 0
      %639 = vmatpush2.bf16.msra.mxu0 0
      %640 = vmatprep.subr.bf16.mxu0 0
      %641 = vmatpush2.bf16.msra.mxu0 0
      %642 = vmatprep.subr.bf16.mxu0 0
      %643 = vmatpush2.bf16.msra.mxu0 0
      %644 = vmatprep.subr.bf16.mxu0 0
      %645 = vmatpush2.bf16.msra.mxu0 0
      %646 = vmatprep.subr.bf16.mxu0 0
      %647 = vmatpush2.bf16.msra.mxu0 0
      %648 = vmatprep.mubr.bf16.mxu0 0
      %649 = vmatmul.mubr.bf16.gmra.mxu0 %v593
      %v650 = vpop.f32.mrf.mxu0
      %v651 = vadd.f32 0.0, %v650
      %v652 = vpop.f32.mrf.mxu0
      %v653 = vpop.f32.mrf.mxu0
      %v654 = vadd.f32 0.0, %v653
      %v655 = vpop.f32.mrf.mxu0
      %656 = vmatprep.mubr.bf16.mxu0 0
      %657 = vmatmul.mubr.bf16.gmra.mxu0 %v596
      %v658 = vpop.f32.mrf.mxu0
      %v659 = vadd.f32 0.0, %v658
      %v660 = vpop.f32.mrf.mxu0
      %v661 = vpop.f32.mrf.mxu0
      %v662 = vadd.f32 0.0, %v661
      %v663 = vpop.f32.mrf.mxu0
      %664 = vmatprep.mubr.bf16.mxu0 0
      %665 = vmatmul.mubr.bf16.gmra.mxu0 %v599
      %v666 = vpop.f32.mrf.mxu0
      %v667 = vadd.f32 0.0, %v666
      %v668 = vpop.f32.mrf.mxu0
      %v669 = vpop.f32.mrf.mxu0
      %v670 = vadd.f32 0.0, %v669
      %v671 = vpop.f32.mrf.mxu0
      %672 = vmatprep.mubr.bf16.mxu0 0
      %673 = vmatmul.mubr.bf16.gmra.mxu0 %v602
      %v674 = vpop.f32.mrf.mxu0
      %v675 = vadd.f32 0.0, %v674
      %v676 = vpop.f32.mrf.mxu0
      %v677 = vpop.f32.mrf.mxu0
      %v678 = vadd.f32 0.0, %v677
      %v679 = vpop.f32.mrf.mxu0
      %680 = vmatprep.mubr.bf16.mxu0 0
      %681 = vmatmul.mubr.bf16.gmra.mxu0 %v605
      %v682 = vpop.f32.mrf.mxu0
      %v683 = vadd.f32 0.0, %v682
      %v684 = vpop.f32.mrf.mxu0
      %v685 = vpop.f32.mrf.mxu0
      %v686 = vadd.f32 0.0, %v685
      %v687 = vpop.f32.mrf.mxu0
      %688 = vmatprep.mubr.bf16.mxu0 0
      %689 = vmatmul.mubr.bf16.gmra.mxu0 %v608
      %v690 = vpop.f32.mrf.mxu0
      %v691 = vadd.f32 0.0, %v690
      %v692 = vpop.f32.mrf.mxu0
      %v693 = vpop.f32.mrf.mxu0
      %v694 = vadd.f32 0.0, %v693
      %v695 = vpop.f32.mrf.mxu0
      %696 = vmatprep.mubr.bf16.mxu0 0
      %697 = vmatmul.mubr.bf16.gmra.mxu0 %v611
      %v698 = vpop.f32.mrf.mxu0
      %v699 = vadd.f32 0.0, %v698
      %v700 = vpop.f32.mrf.mxu0
      %v701 = vpop.f32.mrf.mxu0
      %v702 = vadd.f32 0.0, %v701
      %v703 = vpop.f32.mrf.mxu0
      %704 = vmatprep.mubr.bf16.mxu0 0
      %705 = vmatmul.mubr.bf16.gmra.mxu0 %v614
      %v706 = vpop.f32.mrf.mxu0
      %v707 = vadd.f32 0.0, %v706
      %v708 = vpop.f32.mrf.mxu0
      %v709 = vpop.f32.mrf.mxu0
      %v710 = vadd.f32 0.0, %v709
      %v711 = vpop.f32.mrf.mxu0
      %712 = vdwg.mxu0
      %v721 = vunpack.c.l.b16 %v551
      %v722 = vunpack.c.l.b16 %v552
      %v723 = vunpack.c.l.b16 %v553
      %v724 = vunpack.c.l.b16 %v554
      %v725 = vunpack.c.l.b16 %v555
      %v726 = vunpack.c.l.b16 %v556
      %v727 = vunpack.c.l.b16 %v557
      %v728 = vunpack.c.l.b16 %v558
      %v729 = vpack.c.b16 %v722, %v721
      %v730 = vpack.c.b16 %v724, %v723
      %v731 = vpack.c.b16 %v726, %v725
      %v732 = vpack.c.b16 %v728, %v727
      %v738 = vsel %vm591, %v519, 0
      %v741 = vsel %vm591, %v520, 0
      %v744 = vsel %vm591, %v521, 0
      %v747 = vsel %vm591, %v522, 0
      %v750 = vsel %vm591, %v523, 0
      %v753 = vsel %vm591, %v524, 0
      %v756 = vsel %vm591, %v525, 0
      %v759 = vsel %vm591, %v526, 0
      %761 = vmatprep.subr.bf16.mxu0 0
      %762 = vmatpush1.bf16.msra.mxu0 0
      %763 = vmatprep.subr.bf16.mxu0 0
      %764 = vmatpush1.bf16.msra.mxu0 0
      %765 = vmatprep.subr.bf16.mxu0 0
      %766 = vmatpush1.bf16.msra.mxu0 0
      %767 = vmatprep.subr.bf16.mxu0 0
      %768 = vmatpush1.bf16.msra.mxu0 0
      %769 = vmatprep.subr.bf16.mxu0 0
      %770 = vmatpush1.bf16.msra.mxu0 %v732
      %771 = vmatprep.subr.bf16.mxu0 0
      %772 = vmatpush1.bf16.msra.mxu0 %v731
      %773 = vmatprep.subr.bf16.mxu0 0
      %774 = vmatpush1.bf16.msra.mxu0 %v730
      %775 = vmatprep.subr.bf16.mxu0 0
      %776 = vmatpush1.bf16.msra.mxu0 %v729
      %777 = vmatprep.subr.bf16.mxu0 0
      %778 = vmatpush2.bf16.msra.mxu0 0
      %779 = vmatprep.subr.bf16.mxu0 0
      %780 = vmatpush2.bf16.msra.mxu0 0
      %781 = vmatprep.subr.bf16.mxu0 0
      %782 = vmatpush2.bf16.msra.mxu0 0
      %783 = vmatprep.subr.bf16.mxu0 0
      %784 = vmatpush2.bf16.msra.mxu0 0
      %785 = vmatprep.subr.bf16.mxu0 0
      %786 = vmatpush2.bf16.msra.mxu0 0
      %787 = vmatprep.subr.bf16.mxu0 0
      %788 = vmatpush2.bf16.msra.mxu0 0
      %789 = vmatprep.subr.bf16.mxu0 0
      %790 = vmatpush2.bf16.msra.mxu0 0
      %791 = vmatprep.subr.bf16.mxu0 0
      %792 = vmatpush2.bf16.msra.mxu0 0
      %793 = vmatprep.mubr.bf16.mxu0 0
      %794 = vmatmul.mubr.bf16.gmra.mxu0 %v738
      %v795 = vpop.f32.mrf.mxu0
      %v796 = vadd.f32 %v651, %v795
      %v797 = vpop.f32.mrf.mxu0
      %v798 = vpop.f32.mrf.mxu0
      %v799 = vadd.f32 %v654, %v798
      %v800 = vpop.f32.mrf.mxu0
      %801 = vmatprep.mubr.bf16.mxu0 0
      %802 = vmatmul.mubr.bf16.gmra.mxu0 %v741
      %v803 = vpop.f32.mrf.mxu0
      %v804 = vadd.f32 %v659, %v803
      %v805 = vpop.f32.mrf.mxu0
      %v806 = vpop.f32.mrf.mxu0
      %v807 = vadd.f32 %v662, %v806
      %v808 = vpop.f32.mrf.mxu0
      %809 = vmatprep.mubr.bf16.mxu0 0
      %810 = vmatmul.mubr.bf16.gmra.mxu0 %v744
      %v811 = vpop.f32.mrf.mxu0
      %v812 = vadd.f32 %v667, %v811
      %v813 = vpop.f32.mrf.mxu0
      %v814 = vpop.f32.mrf.mxu0
      %v815 = vadd.f32 %v670, %v814
      %v816 = vpop.f32.mrf.mxu0
      %817 = vmatprep.mubr.bf16.mxu0 0
      %818 = vmatmul.mubr.bf16.gmra.mxu0 %v747
      %v819 = vpop.f32.mrf.mxu0
      %v820 = vadd.f32 %v675, %v819
      %v821 = vpop.f32.mrf.mxu0
      %v822 = vpop.f32.mrf.mxu0
      %v823 = vadd.f32 %v678, %v822
      %v824 = vpop.f32.mrf.mxu0
      %825 = vmatprep.mubr.bf16.mxu0 0
      %826 = vmatmul.mubr.bf16.gmra.mxu0 %v750
      %v827 = vpop.f32.mrf.mxu0
      %v828 = vadd.f32 %v683, %v827
      %v829 = vpop.f32.mrf.mxu0
      %v830 = vpop.f32.mrf.mxu0
      %v831 = vadd.f32 %v686, %v830
      %v832 = vpop.f32.mrf.mxu0
      %833 = vmatprep.mubr.bf16.mxu0 0
      %834 = vmatmul.mubr.bf16.gmra.mxu0 %v753
      %v835 = vpop.f32.mrf.mxu0
      %v836 = vadd.f32 %v691, %v835
      %v837 = vpop.f32.mrf.mxu0
      %v838 = vpop.f32.mrf.mxu0
      %v839 = vadd.f32 %v694, %v838
      %v840 = vpop.f32.mrf.mxu0
      %841 = vmatprep.mubr.bf16.mxu0 0
      %842 = vmatmul.mubr.bf16.gmra.mxu0 %v756
      %v843 = vpop.f32.mrf.mxu0
      %v844 = vadd.f32 %v699, %v843
      %v845 = vpop.f32.mrf.mxu0
      %v846 = vpop.f32.mrf.mxu0
      %v847 = vadd.f32 %v702, %v846
      %v848 = vpop.f32.mrf.mxu0
      %849 = vmatprep.mubr.bf16.mxu0 0
      %850 = vmatmul.mubr.bf16.gmra.mxu0 %v759
      %v851 = vpop.f32.mrf.mxu0
      %v852 = vadd.f32 %v707, %v851
      %v853 = vpop.f32.mrf.mxu0
      %v854 = vpop.f32.mrf.mxu0
      %v855 = vadd.f32 %v710, %v854
      %v856 = vpop.f32.mrf.mxu0
      %857 = vdwg.mxu0
      %v858 = vld [vmem:[%s5] sm:$0x1]
      %v860 = vlaneseq
      %v861 = vshrl.u32 %v860, 7
      %v862 = vsub.s32 0, %v861
      %v863 = vrot.slane %v858, %v862
      %v865 = vadd.f32 %v796, %v863
      %v866 = vadd.f32 %v799, %v863
      %v867 = vadd.f32 %v804, %v863
      %v868 = vadd.f32 %v807, %v863
      %v869 = vadd.f32 %v812, %v863
      %v870 = vadd.f32 %v815, %v863
      %v871 = vadd.f32 %v820, %v863
      %v872 = vadd.f32 %v823, %v863
      %v873 = vadd.f32 %v828, %v863
      %v874 = vadd.f32 %v831, %v863
      %v875 = vadd.f32 %v836, %v863
      %v876 = vadd.f32 %v839, %v863
      %v877 = vadd.f32 %v844, %v863
      %v878 = vadd.f32 %v847, %v863
      %v879 = vadd.f32 %v852, %v863
      %v880 = vadd.f32 %v855, %v863
      %v881 = vtanh.pop %v865
      %v882 = vtanh.pop %v866
      %v883 = vtanh.pop %v867
      %v884 = vtanh.pop %v868
      %v885 = vtanh.pop %v869
      %v886 = vtanh.pop %v870
      %v887 = vtanh.pop %v871
      %v888 = vtanh.pop %v872
      %v889 = vtanh.pop %v873
      %v890 = vtanh.pop %v874
      %v891 = vtanh.pop %v875
      %v892 = vtanh.pop %v876
      %v893 = vtanh.pop %v877
      %v894 = vtanh.pop %v878
      %v895 = vtanh.pop %v879
      %v896 = vtanh.pop %v880
      %v897 = vpack.c.bf16 %v882, %v881
      %v898 = vpack.c.bf16 %v884, %v883
      %v899 = vpack.c.bf16 %v886, %v885
      %v900 = vpack.c.bf16 %v888, %v887
      %v901 = vpack.c.bf16 %v890, %v889
      %v902 = vpack.c.bf16 %v892, %v891
      %v903 = vpack.c.bf16 %v894, %v893
      %v904 = vpack.c.bf16 %v896, %v895
      %v905 = vld [vmem:[%s6] sm:$0xf]
      %v906 = vld [vmem:[%s6 + $0x4] sm:$0xf]
      %v907 = vld [vmem:[%s6 + $0x8] sm:$0xf]
      %v908 = vld [vmem:[%s6 + $0xc] sm:$0xf]
      %v909 = vld [vmem:[%s6 + $0x10] sm:$0xf]
      %v910 = vld [vmem:[%s6 + $0x14] sm:$0xf]
      %v911 = vld [vmem:[%s6 + $0x18] sm:$0xf]
      %v912 = vld [vmem:[%s6 + $0x1c] sm:$0xf]
      %v913 = vld [vmem:[%s7] sm:$0x1]
      %v915 = vlaneseq
      %v916 = vshrl.u32 %v915, 7
      %v917 = vsub.s32 0, %v916
      %v918 = vrot.slane %v913, %v917
      %v928 = vunpack.c.l.b16 %v905
      %v929 = vunpack.c.l.b16 %v906
      %v930 = vunpack.c.l.b16 %v907
      %v931 = vunpack.c.l.b16 %v908
      %v932 = vunpack.c.l.b16 %v909
      %v933 = vunpack.c.l.b16 %v910
      %v934 = vunpack.c.l.b16 %v911
      %v935 = vunpack.c.l.b16 %v912
      %v936 = vpack.c.b16 %v929, %v928
      %v937 = vpack.c.b16 %v931, %v930
      %v938 = vpack.c.b16 %v933, %v932
      %v939 = vpack.c.b16 %v935, %v934
      %v945 = vsel %vm591, %v897, 0
      %v948 = vsel %vm591, %v898, 0
      %v951 = vsel %vm591, %v899, 0
      %v954 = vsel %vm591, %v900, 0
      %v957 = vsel %vm591, %v901, 0
      %v960 = vsel %vm591, %v902, 0
      %v963 = vsel %vm591, %v903, 0
      %v966 = vsel %vm591, %v904, 0
      %968 = vmatprep.subr.bf16.mxu0 0
      %969 = vmatpush1.bf16.msra.mxu0 0
      %970 = vmatprep.subr.bf16.mxu0 0
      %971 = vmatpush1.bf16.msra.mxu0 0
      %972 = vmatprep.subr.bf16.mxu0 0
      %973 = vmatpush1.bf16.msra.mxu0 0
      %974 = vmatprep.subr.bf16.mxu0 0
      %975 = vmatpush1.bf16.msra.mxu0 0
      %976 = vmatprep.subr.bf16.mxu0 0
      %977 = vmatpush1.bf16.msra.mxu0 %v939
      %978 = vmatprep.subr.bf16.mxu0 0
      %979 = vmatpush1.bf16.msra.mxu0 %v938
      %980 = vmatprep.subr.bf16.mxu0 0
      %981 = vmatpush1.bf16.msra.mxu0 %v937
      %982 = vmatprep.subr.bf16.mxu0 0
      %983 = vmatpush1.bf16.msra.mxu0 %v936
      %984 = vmatprep.subr.bf16.mxu0 0
      %985 = vmatpush2.bf16.msra.mxu0 0
      %986 = vmatprep.subr.bf16.mxu0 0
      %987 = vmatpush2.bf16.msra.mxu0 0
      %988 = vmatprep.subr.bf16.mxu0 0
      %989 = vmatpush2.bf16.msra.mxu0 0
      %990 = vmatprep.subr.bf16.mxu0 0
      %991 = vmatpush2.bf16.msra.mxu0 0
      %992 = vmatprep.subr.bf16.mxu0 0
      %993 = vmatpush2.bf16.msra.mxu0 0
      %994 = vmatprep.subr.bf16.mxu0 0
      %995 = vmatpush2.bf16.msra.mxu0 0
      %996 = vmatprep.subr.bf16.mxu0 0
      %997 = vmatpush2.bf16.msra.mxu0 0
      %998 = vmatprep.subr.bf16.mxu0 0
      %999 = vmatpush2.bf16.msra.mxu0 0
      %1000 = vmatprep.mubr.bf16.mxu0 0
      %1001 = vmatmul.mubr.bf16.gmra.mxu0 %v945
      %v1002 = vpop.f32.mrf.mxu0
      %v1003 = vadd.f32 %v918, %v1002
      %v1004 = vpop.f32.mrf.mxu0
      %v1005 = vpop.f32.mrf.mxu0
      %v1006 = vadd.f32 %v918, %v1005
      %v1007 = vpop.f32.mrf.mxu0
      %1008 = vmatprep.mubr.bf16.mxu0 0
      %1009 = vmatmul.mubr.bf16.gmra.mxu0 %v948
      %v1010 = vpop.f32.mrf.mxu0
      %v1011 = vadd.f32 %v918, %v1010
      %v1012 = vpop.f32.mrf.mxu0
      %v1013 = vpop.f32.mrf.mxu0
      %v1014 = vadd.f32 %v918, %v1013
      %v1015 = vpop.f32.mrf.mxu0
      %1016 = vmatprep.mubr.bf16.mxu0 0
      %1017 = vmatmul.mubr.bf16.gmra.mxu0 %v951
      %v1018 = vpop.f32.mrf.mxu0
      %v1019 = vadd.f32 %v918, %v1018
      %v1020 = vpop.f32.mrf.mxu0
      %v1021 = vpop.f32.mrf.mxu0
      %v1022 = vadd.f32 %v918, %v1021
      %v1023 = vpop.f32.mrf.mxu0
      %1024 = vmatprep.mubr.bf16.mxu0 0
      %1025 = vmatmul.mubr.bf16.gmra.mxu0 %v954
      %v1026 = vpop.f32.mrf.mxu0
      %v1027 = vadd.f32 %v918, %v1026
      %v1028 = vpop.f32.mrf.mxu0
      %v1029 = vpop.f32.mrf.mxu0
      %v1030 = vadd.f32 %v918, %v1029
      %v1031 = vpop.f32.mrf.mxu0
      %1032 = vmatprep.mubr.bf16.mxu0 0
      %1033 = vmatmul.mubr.bf16.gmra.mxu0 %v957
      %v1034 = vpop.f32.mrf.mxu0
      %v1035 = vadd.f32 %v918, %v1034
      %v1036 = vpop.f32.mrf.mxu0
      %v1037 = vpop.f32.mrf.mxu0
      %v1038 = vadd.f32 %v918, %v1037
      %v1039 = vpop.f32.mrf.mxu0
      %1040 = vmatprep.mubr.bf16.mxu0 0
      %1041 = vmatmul.mubr.bf16.gmra.mxu0 %v960
      %v1042 = vpop.f32.mrf.mxu0
      %v1043 = vadd.f32 %v918, %v1042
      %v1044 = vpop.f32.mrf.mxu0
      %v1045 = vpop.f32.mrf.mxu0
      %v1046 = vadd.f32 %v918, %v1045
      %v1047 = vpop.f32.mrf.mxu0
      %1048 = vmatprep.mubr.bf16.mxu0 0
      %1049 = vmatmul.mubr.bf16.gmra.mxu0 %v963
      %v1050 = vpop.f32.mrf.mxu0
      %v1051 = vadd.f32 %v918, %v1050
      %v1052 = vpop.f32.mrf.mxu0
      %v1053 = vpop.f32.mrf.mxu0
      %v1054 = vadd.f32 %v918, %v1053
      %v1055 = vpop.f32.mrf.mxu0
      %1056 = vmatprep.mubr.bf16.mxu0 0
      %1057 = vmatmul.mubr.bf16.gmra.mxu0 %v966
      %v1058 = vpop.f32.mrf.mxu0
      %v1059 = vadd.f32 %v918, %v1058
      %v1060 = vpop.f32.mrf.mxu0
      %v1061 = vpop.f32.mrf.mxu0
      %v1062 = vadd.f32 %v918, %v1061
      %v1063 = vpop.f32.mrf.mxu0
      %1064 = vdwg.mxu0
      %v1065 = vld [vmem:[%s8] sm:$0xf]
      %v1066 = vld [vmem:[%s8 + $0x4] sm:$0xf]
      %v1067 = vld [vmem:[%s8 + $0x8] sm:$0xf]
      %v1068 = vld [vmem:[%s8 + $0xc] sm:$0xf]
      %v1069 = vld [vmem:[%s8 + $0x10] sm:$0xf]
      %v1070 = vld [vmem:[%s8 + $0x14] sm:$0xf]
      %v1071 = vld [vmem:[%s8 + $0x18] sm:$0xf]
      %v1072 = vld [vmem:[%s8 + $0x1c] sm:$0xf]
      %v1073 = vld [vmem:[%s9] sm:$0x1]
      %v1075 = vlaneseq
      %v1076 = vshrl.u32 %v1075, 7
      %v1077 = vsub.s32 0, %v1076
      %v1078 = vrot.slane %v1073, %v1077
      %v1088 = vunpack.c.l.b16 %v1065
      %v1089 = vunpack.c.l.b16 %v1066
      %v1090 = vunpack.c.l.b16 %v1067
      %v1091 = vunpack.c.l.b16 %v1068
      %v1092 = vunpack.c.l.b16 %v1069
      %v1093 = vunpack.c.l.b16 %v1070
      %v1094 = vunpack.c.l.b16 %v1071
      %v1095 = vunpack.c.l.b16 %v1072
      %v1096 = vpack.c.b16 %v1089, %v1088
      %v1097 = vpack.c.b16 %v1091, %v1090
      %v1098 = vpack.c.b16 %v1093, %v1092
      %v1099 = vpack.c.b16 %v1095, %v1094
      %1104 = vmatprep.subr.bf16.mxu0 0
      %1105 = vmatpush1.bf16.msra.mxu0 0
      %1106 = vmatprep.subr.bf16.mxu0 0
      %1107 = vmatpush1.bf16.msra.mxu0 0
      %1108 = vmatprep.subr.bf16.mxu0 0
      %1109 = vmatpush1.bf16.msra.mxu0 0
      %1110 = vmatprep.subr.bf16.mxu0 0
      %1111 = vmatpush1.bf16.msra.mxu0 0
      %1112 = vmatprep.subr.bf16.mxu0 0
      %1113 = vmatpush1.bf16.msra.mxu0 %v1099
      %1114 = vmatprep.subr.bf16.mxu0 0
      %1115 = vmatpush1.bf16.msra.mxu0 %v1098
      %1116 = vmatprep.subr.bf16.mxu0 0
      %1117 = vmatpush1.bf16.msra.mxu0 %v1097
      %1118 = vmatprep.subr.bf16.mxu0 0
      %1119 = vmatpush1.bf16.msra.mxu0 %v1096
      %1120 = vmatprep.subr.bf16.mxu0 0
      %1121 = vmatpush2.bf16.msra.mxu0 0
      %1122 = vmatprep.subr.bf16.mxu0 0
      %1123 = vmatpush2.bf16.msra.mxu0 0
      %1124 = vmatprep.subr.bf16.mxu0 0
      %1125 = vmatpush2.bf16.msra.mxu0 0
      %1126 = vmatprep.subr.bf16.mxu0 0
      %1127 = vmatpush2.bf16.msra.mxu0 0
      %1128 = vmatprep.subr.bf16.mxu0 0
      %1129 = vmatpush2.bf16.msra.mxu0 0
      %1130 = vmatprep.subr.bf16.mxu0 0
      %1131 = vmatpush2.bf16.msra.mxu0 0
      %1132 = vmatprep.subr.bf16.mxu0 0
      %1133 = vmatpush2.bf16.msra.mxu0 0
      %1134 = vmatprep.subr.bf16.mxu0 0
      %1135 = vmatpush2.bf16.msra.mxu0 0
      %1136 = vmatprep.mubr.bf16.mxu0 0
      %1137 = vmatmul.mubr.bf16.gmra.mxu0 %v945
      %v1138 = vpop.f32.mrf.mxu0
      %v1139 = vadd.f32 %v1078, %v1138
      %v1140 = vpop.f32.mrf.mxu0
      %v1141 = vpop.f32.mrf.mxu0
      %v1142 = vadd.f32 %v1078, %v1141
      %v1143 = vpop.f32.mrf.mxu0
      %1144 = vmatprep.mubr.bf16.mxu0 0
      %1145 = vmatmul.mubr.bf16.gmra.mxu0 %v948
      %v1146 = vpop.f32.mrf.mxu0
      %v1147 = vadd.f32 %v1078, %v1146
      %v1148 = vpop.f32.mrf.mxu0
      %v1149 = vpop.f32.mrf.mxu0
      %v1150 = vadd.f32 %v1078, %v1149
      %v1151 = vpop.f32.mrf.mxu0
      %1152 = vmatprep.mubr.bf16.mxu0 0
      %1153 = vmatmul.mubr.bf16.gmra.mxu0 %v951
      %v1154 = vpop.f32.mrf.mxu0
      %v1155 = vadd.f32 %v1078, %v1154
      %v1156 = vpop.f32.mrf.mxu0
      %v1157 = vpop.f32.mrf.mxu0
      %v1158 = vadd.f32 %v1078, %v1157
      %v1159 = vpop.f32.mrf.mxu0
      %1160 = vmatprep.mubr.bf16.mxu0 0
      %1161 = vmatmul.mubr.bf16.gmra.mxu0 %v954
      %v1162 = vpop.f32.mrf.mxu0
      %v1163 = vadd.f32 %v1078, %v1162
      %v1164 = vpop.f32.mrf.mxu0
      %v1165 = vpop.f32.mrf.mxu0
      %v1166 = vadd.f32 %v1078, %v1165
      %v1167 = vpop.f32.mrf.mxu0
      %1168 = vmatprep.mubr.bf16.mxu0 0
      %1169 = vmatmul.mubr.bf16.gmra.mxu0 %v957
      %v1170 = vpop.f32.mrf.mxu0
      %v1171 = vadd.f32 %v1078, %v1170
      %v1172 = vpop.f32.mrf.mxu0
      %v1173 = vpop.f32.mrf.mxu0
      %v1174 = vadd.f32 %v1078, %v1173
      %v1175 = vpop.f32.mrf.mxu0
      %1176 = vmatprep.mubr.bf16.mxu0 0
      %1177 = vmatmul.mubr.bf16.gmra.mxu0 %v960
      %v1178 = vpop.f32.mrf.mxu0
      %v1179 = vadd.f32 %v1078, %v1178
      %v1180 = vpop.f32.mrf.mxu0
      %v1181 = vpop.f32.mrf.mxu0
      %v1182 = vadd.f32 %v1078, %v1181
      %v1183 = vpop.f32.mrf.mxu0
      %1184 = vmatprep.mubr.bf16.mxu0 0
      %1185 = vmatmul.mubr.bf16.gmra.mxu0 %v963
      %v1186 = vpop.f32.mrf.mxu0
      %v1187 = vadd.f32 %v1078, %v1186
      %v1188 = vpop.f32.mrf.mxu0
      %v1189 = vpop.f32.mrf.mxu0
      %v1190 = vadd.f32 %v1078, %v1189
      %v1191 = vpop.f32.mrf.mxu0
      %1192 = vmatprep.mubr.bf16.mxu0 0
      %1193 = vmatmul.mubr.bf16.gmra.mxu0 %v966
      %v1194 = vpop.f32.mrf.mxu0
      %v1195 = vadd.f32 %v1078, %v1194
      %v1196 = vpop.f32.mrf.mxu0
      %v1197 = vpop.f32.mrf.mxu0
      %v1198 = vadd.f32 %v1078, %v1197
      %v1199 = vpop.f32.mrf.mxu0
      %1200 = vdwg.mxu0
      %v1201 = vmul.f32 %v1139, 0.5
      %v1202 = vmul.f32 %v1142, 0.5
      %v1203 = vmul.f32 %v1147, 0.5
      %v1204 = vmul.f32 %v1150, 0.5
      %v1205 = vmul.f32 %v1155, 0.5
      %v1206 = vmul.f32 %v1158, 0.5
      %v1207 = vmul.f32 %v1163, 0.5
      %v1208 = vmul.f32 %v1166, 0.5
      %v1209 = vmul.f32 %v1171, 0.5
      %v1210 = vmul.f32 %v1174, 0.5
      %v1211 = vmul.f32 %v1179, 0.5
      %v1212 = vmul.f32 %v1182, 0.5
      %v1213 = vmul.f32 %v1187, 0.5
      %v1214 = vmul.f32 %v1190, 0.5
      %v1215 = vmul.f32 %v1195, 0.5
      %v1216 = vmul.f32 %v1198, 0.5
      %v1217 = vmul.f32 %v1201, 1.442695
      %v1218 = vpow.pop %v1217
      %v1219 = vmul.f32 %v1202, 1.442695
      %v1220 = vpow.pop %v1219
      %v1221 = vmul.f32 %v1203, 1.442695
      %v1222 = vpow.pop %v1221
      %v1223 = vmul.f32 %v1204, 1.442695
      %v1224 = vpow.pop %v1223
      %v1225 = vmul.f32 %v1205, 1.442695
      %v1226 = vpow.pop %v1225
      %v1227 = vmul.f32 %v1206, 1.442695
      %v1228 = vpow.pop %v1227
      %v1229 = vmul.f32 %v1207, 1.442695
      %v1230 = vpow.pop %v1229
      %v1231 = vmul.f32 %v1208, 1.442695
      %v1232 = vpow.pop %v1231
      %v1233 = vmul.f32 %v1209, 1.442695
      %v1234 = vpow.pop %v1233
      %v1235 = vmul.f32 %v1210, 1.442695
      %v1236 = vpow.pop %v1235
      %v1237 = vmul.f32 %v1211, 1.442695
      %v1238 = vpow.pop %v1237
      %v1239 = vmul.f32 %v1212, 1.442695
      %v1240 = vpow.pop %v1239
      %v1241 = vmul.f32 %v1213, 1.442695
      %v1242 = vpow.pop %v1241
      %v1243 = vmul.f32 %v1214, 1.442695
      %v1244 = vpow.pop %v1243
      %v1245 = vmul.f32 %v1215, 1.442695
      %v1246 = vpow.pop %v1245
      %v1247 = vmul.f32 %v1216, 1.442695
      %v1248 = vpow.pop %v1247
      %v1249 = vld [vmem:[%s488] sm:$0xff]
      %v1250 = vld [vmem:[%s488 + $0x8] sm:$0xff]
      %v1251 = vld [vmem:[%s488 + $0x10] sm:$0xff]
      %v1252 = vld [vmem:[%s488 + $0x18] sm:$0xff]
      %v1253 = vld [vmem:[%s488 + $0x20] sm:$0xff]
      %v1254 = vld [vmem:[%s488 + $0x28] sm:$0xff]
      %v1255 = vld [vmem:[%s488 + $0x30] sm:$0xff]
      %v1256 = vld [vmem:[%s488 + $0x38] sm:$0xff]
      %v1257 = vld [vmem:[%s488 + $0x40] sm:$0xff]
      %v1258 = vld [vmem:[%s488 + $0x48] sm:$0xff]
      %v1259 = vld [vmem:[%s488 + $0x50] sm:$0xff]
      %v1260 = vld [vmem:[%s488 + $0x58] sm:$0xff]
      %v1261 = vld [vmem:[%s488 + $0x60] sm:$0xff]
      %v1262 = vld [vmem:[%s488 + $0x68] sm:$0xff]
      %v1263 = vld [vmem:[%s488 + $0x70] sm:$0xff]
      %v1264 = vld [vmem:[%s488 + $0x78] sm:$0xff]
      %v1265 = vmul.f32 %v1218, %v1249
      %v1266 = vmul.f32 %v1220, %v1250
      %v1267 = vmul.f32 %v1222, %v1251
      %v1268 = vmul.f32 %v1224, %v1252
      %v1269 = vmul.f32 %v1226, %v1253
      %v1270 = vmul.f32 %v1228, %v1254
      %v1271 = vmul.f32 %v1230, %v1255
      %v1272 = vmul.f32 %v1232, %v1256
      %v1273 = vmul.f32 %v1234, %v1257
      %v1274 = vmul.f32 %v1236, %v1258
      %v1275 = vmul.f32 %v1238, %v1259
      %v1276 = vmul.f32 %v1240, %v1260
      %v1277 = vmul.f32 %v1242, %v1261
      %v1278 = vmul.f32 %v1244, %v1262
      %v1279 = vmul.f32 %v1246, %v1263
      %v1280 = vmul.f32 %v1248, %v1264
      %v1281 = vadd.f32 %v1003, %v1265
      %v1282 = vadd.f32 %v1006, %v1266
      %v1283 = vadd.f32 %v1011, %v1267
      %v1284 = vadd.f32 %v1014, %v1268
      %v1285 = vadd.f32 %v1019, %v1269
      %v1286 = vadd.f32 %v1022, %v1270
      %v1287 = vadd.f32 %v1027, %v1271
      %v1288 = vadd.f32 %v1030, %v1272
      %v1289 = vadd.f32 %v1035, %v1273
      %v1290 = vadd.f32 %v1038, %v1274
      %v1291 = vadd.f32 %v1043, %v1275
      %v1292 = vadd.f32 %v1046, %v1276
      %v1293 = vadd.f32 %v1051, %v1277
      %v1294 = vadd.f32 %v1054, %v1278
      %v1295 = vadd.f32 %v1059, %v1279
      %v1296 = vadd.f32 %v1062, %v1280
      %vm1297 = vcmask 261120
      %1298 = vst.msk [vmem:[%s500] sm:$0xff] %vm1297, %v1281
      %1299 = vst.msk [vmem:[%s500 + $0x8] sm:$0xff] %vm1297, %v1282
      %1300 = vst.msk [vmem:[%s500 + $0x10] sm:$0xff] %vm1297, %v1283
      %1301 = vst.msk [vmem:[%s500 + $0x18] sm:$0xff] %vm1297, %v1284
      %1302 = vst.msk [vmem:[%s500 + $0x20] sm:$0xff] %vm1297, %v1285
      %1303 = vst.msk [vmem:[%s500 + $0x28] sm:$0xff] %vm1297, %v1286
      %1304 = vst.msk [vmem:[%s500 + $0x30] sm:$0xff] %vm1297, %v1287
      %1305 = vst.msk [vmem:[%s500 + $0x38] sm:$0xff] %vm1297, %v1288
      %1306 = vst.msk [vmem:[%s500 + $0x40] sm:$0xff] %vm1297, %v1289
      %1307 = vst.msk [vmem:[%s500 + $0x48] sm:$0xff] %vm1297, %v1290
      %1308 = vst.msk [vmem:[%s500 + $0x50] sm:$0xff] %vm1297, %v1291
      %1309 = vst.msk [vmem:[%s500 + $0x58] sm:$0xff] %vm1297, %v1292
      %1310 = vst.msk [vmem:[%s500 + $0x60] sm:$0xff] %vm1297, %v1293
      %1311 = vst.msk [vmem:[%s500 + $0x68] sm:$0xff] %vm1297, %v1294
      %1312 = vst.msk [vmem:[%s500 + $0x70] sm:$0xff] %vm1297, %v1295
      %1313 = vst.msk [vmem:[%s500 + $0x78] sm:$0xff] %vm1297, %v1296
      %v1314 = vmul.f32 %v1281, %v1281
      %v1315 = vmul.f32 %v1282, %v1282
      %v1316 = vmul.f32 %v1283, %v1283
      %v1317 = vmul.f32 %v1284, %v1284
      %v1318 = vmul.f32 %v1285, %v1285
      %v1319 = vmul.f32 %v1286, %v1286
      %v1320 = vmul.f32 %v1287, %v1287
      %v1321 = vmul.f32 %v1288, %v1288
      %v1322 = vmul.f32 %v1289, %v1289
      %v1323 = vmul.f32 %v1290, %v1290
      %v1324 = vmul.f32 %v1291, %v1291
      %v1325 = vmul.f32 %v1292, %v1292
      %v1326 = vmul.f32 %v1293, %v1293
      %v1327 = vmul.f32 %v1294, %v1294
      %v1328 = vmul.f32 %v1295, %v1295
      %v1329 = vmul.f32 %v1296, %v1296
      %1346 = vrot.lane.b32.xlu0 %v1281, 32
      %v1347 = vpop.permute.xlu0 %1346
      %1348 = vrot.lane.b32.xlu0 %v1282, 32
      %v1349 = vpop.permute.xlu0 %1348
      %1350 = vrot.lane.b32.xlu0 %v1283, 32
      %v1351 = vpop.permute.xlu0 %1350
      %1352 = vrot.lane.b32.xlu0 %v1284, 32
      %v1353 = vpop.permute.xlu0 %1352
      %1354 = vrot.lane.b32.xlu0 %v1285, 32
      %v1355 = vpop.permute.xlu0 %1354
      %1356 = vrot.lane.b32.xlu0 %v1286, 32
      %v1357 = vpop.permute.xlu0 %1356
      %1358 = vrot.lane.b32.xlu0 %v1287, 32
      %v1359 = vpop.permute.xlu0 %1358
      %1360 = vrot.lane.b32.xlu0 %v1288, 32
      %v1361 = vpop.permute.xlu0 %1360
      %1362 = vrot.lane.b32.xlu0 %v1289, 32
      %v1363 = vpop.permute.xlu0 %1362
      %1364 = vrot.lane.b32.xlu0 %v1290, 32
      %v1365 = vpop.permute.xlu0 %1364
      %1366 = vrot.lane.b32.xlu0 %v1291, 32
      %v1367 = vpop.permute.xlu0 %1366
      %1368 = vrot.lane.b32.xlu0 %v1292, 32
      %v1369 = vpop.permute.xlu0 %1368
      %1370 = vrot.lane.b32.xlu0 %v1293, 32
      %v1371 = vpop.permute.xlu0 %1370
      %1372 = vrot.lane.b32.xlu0 %v1294, 32
      %v1373 = vpop.permute.xlu0 %1372
      %1374 = vrot.lane.b32.xlu0 %v1295, 32
      %v1375 = vpop.permute.xlu0 %1374
      %1376 = vrot.lane.b32.xlu0 %v1296, 32
      %v1377 = vpop.permute.xlu0 %1376
      %v1394 = vsel %vm1297, %v1314, %v1347
      %v1395 = vsel %vm1297, %v1315, %v1349
      %v1396 = vsel %vm1297, %v1316, %v1351
      %v1397 = vsel %vm1297, %v1317, %v1353
      %v1398 = vsel %vm1297, %v1318, %v1355
      %v1399 = vsel %vm1297, %v1319, %v1357
      %v1400 = vsel %vm1297, %v1320, %v1359
      %v1401 = vsel %vm1297, %v1321, %v1361
      %v1402 = vsel %vm1297, %v1322, %v1363
      %v1403 = vsel %vm1297, %v1323, %v1365
      %v1404 = vsel %vm1297, %v1324, %v1367
      %v1405 = vsel %vm1297, %v1325, %v1369
      %v1406 = vsel %vm1297, %v1326, %v1371
      %v1407 = vsel %vm1297, %v1327, %v1373
      %v1408 = vsel %vm1297, %v1328, %v1375
      %v1409 = vsel %vm1297, %v1329, %v1377
      %v1410 = vld [vmem:[%s10] sm:$0xff]
      %v1411 = vld [vmem:[%s10 + $0x8] sm:$0xff]
      %v1412 = vld [vmem:[%s10 + $0x10] sm:$0xff]
      %v1413 = vld [vmem:[%s10 + $0x18] sm:$0xff]
      %v1414 = vld [vmem:[%s10 + $0x20] sm:$0xff]
      %v1415 = vld [vmem:[%s10 + $0x28] sm:$0xff]
      %v1416 = vld [vmem:[%s10 + $0x30] sm:$0xff]
      %v1417 = vld [vmem:[%s10 + $0x38] sm:$0xff]
      %v1418 = vld [vmem:[%s11] sm:$0x1]
      %v1420 = vlaneseq
      %v1421 = vshrl.u32 %v1420, 7
      %v1422 = vsub.s32 0, %v1421
      %v1423 = vrot.slane %v1418, %v1422
      %v1426 = vsel %vm591, %v1394, 0
      %v1429 = vsel %vm591, %v1395, 0
      %v1432 = vsel %vm591, %v1396, 0
      %v1435 = vsel %vm591, %v1397, 0
      %v1438 = vsel %vm591, %v1398, 0
      %v1441 = vsel %vm591, %v1399, 0
      %v1444 = vsel %vm591, %v1400, 0
      %v1447 = vsel %vm591, %v1401, 0
      %v1450 = vsel %vm591, %v1402, 0
      %v1453 = vsel %vm591, %v1403, 0
      %v1456 = vsel %vm591, %v1404, 0
      %v1459 = vsel %vm591, %v1405, 0
      %v1462 = vsel %vm591, %v1406, 0
      %v1465 = vsel %vm591, %v1407, 0
      %v1468 = vsel %vm591, %v1408, 0
      %v1471 = vsel %vm591, %v1409, 0
      %1473 = vmatprep.subr.mxu0 0.0
      %1474 = vmatpush1.msra.mxu0 0.0
      %1475 = vmatprep.subr.mxu0 0.0
      %1476 = vmatpush1.msra.mxu0 0.0
      %1477 = vmatprep.subr.mxu0 0.0
      %1478 = vmatpush1.msra.mxu0 0.0
      %1479 = vmatprep.subr.mxu0 0.0
      %1480 = vmatpush1.msra.mxu0 0.0
      %1481 = vmatprep.subr.mxu0 0.0
      %1482 = vmatpush1.msra.mxu0 0.0
      %1483 = vmatprep.subr.mxu0 0.0
      %1484 = vmatpush1.msra.mxu0 0.0
      %1485 = vmatprep.subr.mxu0 0.0
      %1486 = vmatpush1.msra.mxu0 0.0
      %1487 = vmatprep.subr.mxu0 0.0
      %1488 = vmatpush1.msra.mxu0 0.0
      %1489 = vmatprep.subr.mxu0 0.0
      %1490 = vmatpush1.msra.mxu0 %v1417
      %1491 = vmatprep.subr.mxu0 0.0
      %1492 = vmatpush1.msra.mxu0 %v1416
      %1493 = vmatprep.subr.mxu0 0.0
      %1494 = vmatpush1.msra.mxu0 %v1415
      %1495 = vmatprep.subr.mxu0 0.0
      %1496 = vmatpush1.msra.mxu0 %v1414
      %1497 = vmatprep.subr.mxu0 0.0
      %1498 = vmatpush1.msra.mxu0 %v1413
      %1499 = vmatprep.subr.mxu0 0.0
      %1500 = vmatpush1.msra.mxu0 %v1412
      %1501 = vmatprep.subr.mxu0 0.0
      %1502 = vmatpush1.msra.mxu0 %v1411
      %1503 = vmatprep.subr.mxu0 0.0
      %1504 = vmatpush1.msra.mxu0 %v1410
      %1505 = vmatprep.subr.mxu0 0.0
      %1506 = vmatpush2.msra.mxu0 0.0
      %1507 = vmatprep.subr.mxu0 0.0
      %1508 = vmatpush2.msra.mxu0 0.0
      %1509 = vmatprep.subr.mxu0 0.0
      %1510 = vmatpush2.msra.mxu0 0.0
      %1511 = vmatprep.subr.mxu0 0.0
      %1512 = vmatpush2.msra.mxu0 0.0
      %1513 = vmatprep.subr.mxu0 0.0
      %1514 = vmatpush2.msra.mxu0 0.0
      %1515 = vmatprep.subr.mxu0 0.0
      %1516 = vmatpush2.msra.mxu0 0.0
      %1517 = vmatprep.subr.mxu0 0.0
      %1518 = vmatpush2.msra.mxu0 0.0
      %1519 = vmatprep.subr.mxu0 0.0
      %1520 = vmatpush2.msra.mxu0 0.0
      %1521 = vmatprep.subr.mxu0 0.0
      %1522 = vmatpush2.msra.mxu0 0.0
      %1523 = vmatprep.subr.mxu0 0.0
      %1524 = vmatpush2.msra.mxu0 0.0
      %1525 = vmatprep.subr.mxu0 0.0
      %1526 = vmatpush2.msra.mxu0 0.0
      %1527 = vmatprep.subr.mxu0 0.0
      %1528 = vmatpush2.msra.mxu0 0.0
      %1529 = vmatprep.subr.mxu0 0.0
      %1530 = vmatpush2.msra.mxu0 0.0
      %1531 = vmatprep.subr.mxu0 0.0
      %1532 = vmatpush2.msra.mxu0 0.0
      %1533 = vmatprep.subr.mxu0 0.0
      %1534 = vmatpush2.msra.mxu0 0.0
      %1535 = vmatprep.subr.mxu0 0.0
      %1536 = vmatpush2.msra.mxu0 0.0
      %1537 = vmatprep.mubr.f32.mxu0 0.0
      %1538 = vmatmul.mubr.f32.gmra.mxu0 %v1426
      %v1539 = vpop.f32.mrf.mxu0
      %v1540 = vadd.f32 %v1423, %v1539
      %v1541 = vpop.f32.mrf.mxu0
      %1542 = vmatprep.mubr.f32.mxu0 0.0
      %1543 = vmatmul.mubr.f32.gmra.mxu0 %v1429
      %v1544 = vpop.f32.mrf.mxu0
      %v1545 = vadd.f32 %v1423, %v1544
      %v1546 = vpop.f32.mrf.mxu0
      %1547 = vmatprep.mubr.f32.mxu0 0.0
      %1548 = vmatmul.mubr.f32.gmra.mxu0 %v1432
      %v1549 = vpop.f32.mrf.mxu0
      %v1550 = vadd.f32 %v1423, %v1549
      %v1551 = vpop.f32.mrf.mxu0
      %1552 = vmatprep.mubr.f32.mxu0 0.0
      %1553 = vmatmul.mubr.f32.gmra.mxu0 %v1435
      %v1554 = vpop.f32.mrf.mxu0
      %v1555 = vadd.f32 %v1423, %v1554
      %v1556 = vpop.f32.mrf.mxu0
      %1557 = vmatprep.mubr.f32.mxu0 0.0
      %1558 = vmatmul.mubr.f32.gmra.mxu0 %v1438
      %v1559 = vpop.f32.mrf.mxu0
      %v1560 = vadd.f32 %v1423, %v1559
      %v1561 = vpop.f32.mrf.mxu0
      %1562 = vmatprep.mubr.f32.mxu0 0.0
      %1563 = vmatmul.mubr.f32.gmra.mxu0 %v1441
      %v1564 = vpop.f32.mrf.mxu0
      %v1565 = vadd.f32 %v1423, %v1564
      %v1566 = vpop.f32.mrf.mxu0
      %1567 = vmatprep.mubr.f32.mxu0 0.0
      %1568 = vmatmul.mubr.f32.gmra.mxu0 %v1444
      %v1569 = vpop.f32.mrf.mxu0
      %v1570 = vadd.f32 %v1423, %v1569
      %v1571 = vpop.f32.mrf.mxu0
      %1572 = vmatprep.mubr.f32.mxu0 0.0
      %1573 = vmatmul.mubr.f32.gmra.mxu0 %v1447
      %v1574 = vpop.f32.mrf.mxu0
      %v1575 = vadd.f32 %v1423, %v1574
      %v1576 = vpop.f32.mrf.mxu0
      %1577 = vmatprep.mubr.f32.mxu0 0.0
      %1578 = vmatmul.mubr.f32.gmra.mxu0 %v1450
      %v1579 = vpop.f32.mrf.mxu0
      %v1580 = vadd.f32 %v1423, %v1579
      %v1581 = vpop.f32.mrf.mxu0
      %1582 = vmatprep.mubr.f32.mxu0 0.0
      %1583 = vmatmul.mubr.f32.gmra.mxu0 %v1453
      %v1584 = vpop.f32.mrf.mxu0
      %v1585 = vadd.f32 %v1423, %v1584
      %v1586 = vpop.f32.mrf.mxu0
      %1587 = vmatprep.mubr.f32.mxu0 0.0
      %1588 = vmatmul.mubr.f32.gmra.mxu0 %v1456
      %v1589 = vpop.f32.mrf.mxu0
      %v1590 = vadd.f32 %v1423, %v1589
      %v1591 = vpop.f32.mrf.mxu0
      %1592 = vmatprep.mubr.f32.mxu0 0.0
      %1593 = vmatmul.mubr.f32.gmra.mxu0 %v1459
      %v1594 = vpop.f32.mrf.mxu0
      %v1595 = vadd.f32 %v1423, %v1594
      %v1596 = vpop.f32.mrf.mxu0
      %1597 = vmatprep.mubr.f32.mxu0 0.0
      %1598 = vmatmul.mubr.f32.gmra.mxu0 %v1462
      %v1599 = vpop.f32.mrf.mxu0
      %v1600 = vadd.f32 %v1423, %v1599
      %v1601 = vpop.f32.mrf.mxu0
      %1602 = vmatprep.mubr.f32.mxu0 0.0
      %1603 = vmatmul.mubr.f32.gmra.mxu0 %v1465
      %v1604 = vpop.f32.mrf.mxu0
      %v1605 = vadd.f32 %v1423, %v1604
      %v1606 = vpop.f32.mrf.mxu0
      %1607 = vmatprep.mubr.f32.mxu0 0.0
      %1608 = vmatmul.mubr.f32.gmra.mxu0 %v1468
      %v1609 = vpop.f32.mrf.mxu0
      %v1610 = vadd.f32 %v1423, %v1609
      %v1611 = vpop.f32.mrf.mxu0
      %1612 = vmatprep.mubr.f32.mxu0 0.0
      %1613 = vmatmul.mubr.f32.gmra.mxu0 %v1471
      %v1614 = vpop.f32.mrf.mxu0
      %v1615 = vadd.f32 %v1423, %v1614
      %v1616 = vpop.f32.mrf.mxu0
      %1617 = vdwg.mxu0
      %v1618 = vmul.f32 %v1540, 1.442695
      %v1619 = vpow.pop %v1618
      %v1620 = vmul.f32 %v1545, 1.442695
      %v1621 = vpow.pop %v1620
      %v1622 = vmul.f32 %v1550, 1.442695
      %v1623 = vpow.pop %v1622
      %v1624 = vmul.f32 %v1555, 1.442695
      %v1625 = vpow.pop %v1624
      %v1626 = vmul.f32 %v1560, 1.442695
      %v1627 = vpow.pop %v1626
      %v1628 = vmul.f32 %v1565, 1.442695
      %v1629 = vpow.pop %v1628
      %v1630 = vmul.f32 %v1570, 1.442695
      %v1631 = vpow.pop %v1630
      %v1632 = vmul.f32 %v1575, 1.442695
      %v1633 = vpow.pop %v1632
      %v1634 = vmul.f32 %v1580, 1.442695
      %v1635 = vpow.pop %v1634
      %v1636 = vmul.f32 %v1585, 1.442695
      %v1637 = vpow.pop %v1636
      %v1638 = vmul.f32 %v1590, 1.442695
      %v1639 = vpow.pop %v1638
      %v1640 = vmul.f32 %v1595, 1.442695
      %v1641 = vpow.pop %v1640
      %v1642 = vmul.f32 %v1600, 1.442695
      %v1643 = vpow.pop %v1642
      %v1644 = vmul.f32 %v1605, 1.442695
      %v1645 = vpow.pop %v1644
      %v1646 = vmul.f32 %v1610, 1.442695
      %v1647 = vpow.pop %v1646
      %v1648 = vmul.f32 %v1615, 1.442695
      %v1649 = vpow.pop %v1648
      %vm1650 = vcmask 80896
      %1651 = vst.msk [vmem:[%s494] sm:$0xff] %vm1650, %v1619
      %1652 = vst.msk [vmem:[%s494 + $0x8] sm:$0xff] %vm1650, %v1621
      %1653 = vst.msk [vmem:[%s494 + $0x10] sm:$0xff] %vm1650, %v1623
      %1654 = vst.msk [vmem:[%s494 + $0x18] sm:$0xff] %vm1650, %v1625
      %1655 = vst.msk [vmem:[%s494 + $0x20] sm:$0xff] %vm1650, %v1627
      %1656 = vst.msk [vmem:[%s494 + $0x28] sm:$0xff] %vm1650, %v1629
      %1657 = vst.msk [vmem:[%s494 + $0x30] sm:$0xff] %vm1650, %v1631
      %1658 = vst.msk [vmem:[%s494 + $0x38] sm:$0xff] %vm1650, %v1633
      %1659 = vst.msk [vmem:[%s494 + $0x40] sm:$0xff] %vm1650, %v1635
      %1660 = vst.msk [vmem:[%s494 + $0x48] sm:$0xff] %vm1650, %v1637
      %1661 = vst.msk [vmem:[%s494 + $0x50] sm:$0xff] %vm1650, %v1639
      %1662 = vst.msk [vmem:[%s494 + $0x58] sm:$0xff] %vm1650, %v1641
      %1663 = vst.msk [vmem:[%s494 + $0x60] sm:$0xff] %vm1650, %v1643
      %1664 = vst.msk [vmem:[%s494 + $0x68] sm:$0xff] %vm1650, %v1645
      %1665 = vst.msk [vmem:[%s494 + $0x70] sm:$0xff] %vm1650, %v1647
      %1666 = vst.msk [vmem:[%s494 + $0x78] sm:$0xff] %vm1650, %v1649
      %s1667 = smul.u32 16, %s25
      %p1668 = scmp.lt.s32.totalorder %s1667, 31
      %s1669 = scalar_select %p1668, %s1667, 31
      %s1670 = smul.addr %s1669, 8
      %s1671 = scalar_lea.vmem %s12, %s1670
      %s1672 = smul.u32 16, %s25
      %p1673 = scmp.lt.s32.totalorder %s1672, 31
      %s1674 = scalar_select %p1673, %s1672, 31
      %s1675 = smul.addr %s1674, 8
      %s1676 = scalar_lea.vmem %s13, %s1675
      // Predicated region
      $region69: #{tpu_custom_call.1} parent=67 // pred_check
        %p1677 = pneg %p310
      $region70: #{tpu_custom_call.1} parent=67 // pred_check_branch
        %1679 = sbr.rel (%p1677) target = $region72
      $region71: #{tpu_custom_call.1} parent=67 // pred_region
        %s1680 = smul.u32 16, %s25
      $region72: #{tpu_custom_call.1} parent=67 // pred_fallthru
        _
      // Predicated region
      $region73: #{tpu_custom_call.1} parent=67 // pred_check
        %p1681 = pneg %p336
      $region74: #{tpu_custom_call.1} parent=67 // pred_check_branch
        %1683 = sbr.rel (%p1681) target = $region76
      $region75: #{tpu_custom_call.1} parent=67 // pred_region
        %s1684 = smul.u32 16, %s25
      $region76: #{tpu_custom_call.1} parent=67 // pred_fallthru
        _
    $region68: #{tpu_custom_call.1} parent=5 // pred_fallthru
      _
    %p1685 = scmp.le.s32.totalorder 2, %s20
    // Predicated region
    $region77: #{tpu_custom_call.1} parent=5 // pred_check
      %p1686 = pneg %p1685
    $region78: #{tpu_custom_call.1} parent=5 // pred_check_branch
      %1688 = sbr.rel (%p1686) target = $region80
    $region79: #{tpu_custom_call.1} parent=5 // pred_region
      %s1689 = ssub.s32 %s20, 2
      // Predicated region
      $region81: #{tpu_custom_call.1} parent=79 // pred_check
        %p1690 = pneg %p316
      $region82: #{tpu_custom_call.1} parent=79 // pred_check_branch
        %1692 = sbr.rel (%p1690) target = $region84
      $region83: #{tpu_custom_call.1} parent=79 // pred_region
        %s1693 = smul.u32 16, %s26
        %p1694 = scmp.lt.s32.totalorder %s1693, 31
        %s1695 = scalar_select %p1694, %s1693, 31
        %s1696 = smul.addr %s1695, 8
        %s1697 = scalar_lea.vmem %s12, %s1696
      $region84: #{tpu_custom_call.1} parent=79 // pred_fallthru
        _
      // Predicated region
      $region85: #{tpu_custom_call.1} parent=79 // pred_check
        %p1698 = pneg %p342
      $region86: #{tpu_custom_call.1} parent=79 // pred_check_branch
        %1700 = sbr.rel (%p1698) target = $region88
      $region87: #{tpu_custom_call.1} parent=79 // pred_region
        %s1701 = smul.u32 16, %s26
        %p1702 = scmp.lt.s32.totalorder %s1701, 31
        %s1703 = scalar_select %p1702, %s1701, 31
        %s1704 = smul.addr %s1703, 8
        %s1705 = scalar_lea.vmem %s13, %s1704
      $region88: #{tpu_custom_call.1} parent=79 // pred_fallthru
        _
    $region80: #{tpu_custom_call.1} parent=5 // pred_fallthru
      _
  $region6: #{tpu_custom_call.1} parent=0 // loop_footer
    %s24 = sadd.s32 1, %s20
  $region7: #{tpu_custom_call.1} parent=0 // loop_footer_branch
    %19 = sbr.rel target = $region3
  $region8: #{tpu_custom_call.1} parent=0 // loop_exit
    _

</llo_original>
